<compile_context>
chip_gen: v6e
topology: v6e:2x2x1
jax: 0.10.0
libtpu: 0.0.40
codegen_flags: <defaults>
</compile_context>

<pallas_src>
import functools

import jax
import jax.numpy as jnp
from jax.experimental import pallas as pl
from jax.experimental.pallas import tpu as pltpu


# ----------------------------- config ---------------------------------------
NUM_EMBEDDINGS = 4           # cfg['num_embeddings']
HIDDEN_DIM = 32              # cfg['hidden_dim']
STEP = 0.25                  # cfg['step']
N_RAYS = 8
N_SAMPLES = 16               # samples along each ray

POS_ENC = 3 + 6 * NUM_EMBEDDINGS            # 27
INPUT_ENC = 2 * POS_ENC                     # 54
HALF_HIDDEN = HIDDEN_DIM // 2               # 16
MATMUL_DTYPE = jnp.bfloat16                 # MXU operand dtype (f32 accumulation)

# Samples packed per lane-row (block-diagonal weights).  8 fills the 256-wide
# v6e/v7x MXU; a v5e (128-wide MXU) build would use 4.  Must divide N_SAMPLES.
PACK = 8
MAX_PACKED_ROW_TILE = 2048                  # 2048 packed rows == 16K samples @ PACK=8


# ----------------------------- glue (plain JAX) ------------------------------
def positional_encoding(x, num_embeddings):
    """Matches the PyTorch PositionalEncoding ordering exactly."""
    embeddings = [jnp.sin(jnp.pi * x), jnp.cos(jnp.pi * x)]
    for i in range(1, num_embeddings):
        embeddings.append(jnp.sin(jnp.pi * 2 * i * x))
        embeddings.append(jnp.cos(jnp.pi * 2 * i * x))
    embeddings.append(x)
    return jnp.concatenate(embeddings, axis=-1)


def get_samples(ray_o, ray_d, step, num_samples):
    # TODO(synk): Camera.get_samples is not provided in the reference; this uses
    # uniform stepping along the ray: sample_j = o + (j+1)*step * d, shape (N, S, 3).
    t = (jnp.arange(num_samples, dtype=ray_o.dtype) + 1.0) * step
    return ray_o[:, None, :] + t[None, :, None] * ray_d[:, None, :]


# ----------------------------- Pallas kernel ---------------------------------
def nerf_mlp_kernel(
    pos_ref,            # (tm, G*27)  bf16  packed positional encodings
    dinit_ref,          # (tr, G*32)  f32   per-ray dir@w_init_d, lane-tiled Gx
    dsk2_ref,           # (tr, G*16)  f32   per-ray dir@w_sk2_d,  lane-tiled Gx
    w_pos_ref,          # (G*27, 2*G*32) bf16  [blkdiag(w_init_p) | blkdiag(w_sk1_p)]
    b_init_ref,         # (1, G*32) f32
    w_hid_ref,          # (G*32, G*32) bf16    blkdiag(w_hid)
    b_hid_ref,          # (1, G*32) f32
    w_sk1x_ref,         # (G*32, G*32) bf16    blkdiag(w_sk1_x)
    b_sk1_ref,          # (1, G*32) f32
    w_head_ref,         # (G*32, G*16 + G*4) bf16  [blkdiag(w_sk2_x) | den->lane 4g]
    b_sk2_ref,          # (1, G*16) f32
    w_rgb_ref,          # (G*16, G*4) bf16     rgb -> lanes 4g+1..4g+3
    b_out_ref,          # (1, G*4)  f32        interleaved [b_den, b_rgb]
    out_ref,            # (tm, G*4) f32        interleaved [den, r, g, b] per sample
):
    tm = pos_ref.shape[0]                   # packed rows in this tile
    tr = dinit_ref.shape[0]                 # rays in this tile
    rpr = tm // tr                          # packed rows per ray (static)
    gh = dinit_ref.shape[1]                 # G*32
    gs = dsk2_ref.shape[1]                  # G*16
    go = out_ref.shape[1]                   # G*4

    def mm(x, w_ref):
        # bf16 operands, f32 accumulation (elementwise math stays f32).
        return jnp.dot(x.astype(w_ref.dtype), w_ref[...],
                       preferred_element_type=jnp.float32)

    def rows_from_rays(ref):
        # Replicate per-ray rows to packed sample rows (each ray owns `rpr`
        # consecutive packed rows).  Single broadcast+collapse, done once.
        d = ref[...]
        if rpr == 1:
            return d
        c = d.shape[1]
        return jnp.broadcast_to(d[:, None, :], (tr, rpr, c)).reshape(tm, c)

    # Hoisted bias broadcasts (JAX does not CSE broadcast_in_dim).
    b_init = jnp.broadcast_to(b_init_ref[...], (tm, gh))
    b_hid = jnp.broadcast_to(b_hid_ref[...], (tm, gh))
    b_sk1 = jnp.broadcast_to(b_sk1_ref[...], (tm, gh))
    b_sk2 = jnp.broadcast_to(b_sk2_ref[...], (tm, gs))
    b_out = jnp.broadcast_to(b_out_ref[...], (tm, go))

    # Fused pos matmul: pos @ [blkdiag(w_init_p) | blkdiag(w_sk1_p)]; pos dies here.
    pos_out = mm(pos_ref[...], w_pos_ref)                  # (tm, 2*gh) f32
    init_pre, sk1_pos = pos_out[:, :gh], pos_out[:, gh:]

    # initial_layer(cat(pos, dir)): dir contribution precomputed per ray.
    x = jax.nn.relu(init_pre + rows_from_rays(dinit_ref) + b_init)

    # 5x shared hidden_layer with the positional skip after i == 3.
    for i in range(5):
        x = jax.nn.relu(mm(x, w_hid_ref) + b_hid)
        if i == 3:
            # skip_layer1(cat(x, pos)) == x @ W_x + pos @ W_p + b
            x = jax.nn.relu(mm(x, w_sk1x_ref) + sk1_pos + b_sk1)

    # Heads: one matmul for x @ [blkdiag(w_sk2_x) | w_den scattered to out lanes].
    head = mm(x, w_head_ref)                               # (tm, gs + go) f32
    h = jax.nn.relu(head[:, :gs] + rows_from_rays(dsk2_ref) + b_sk2)   # skip_layer2
    den_pre = head[:, gs:]                                 # nonzero only at lanes 4g
    rgb_pre = mm(h, w_rgb_ref)                             # nonzero only at lanes 4g+1..3

    # density / rgb occupy disjoint output lanes -> one sigmoid, one store.
    out_ref[...] = jax.nn.sigmoid(den_pre + rgb_pre + b_out)


# ----------------------------- pallas_call wrapper ---------------------------
def _pick_packed_tile(total_rows, rows_per_ray, n_rays, max_tile=MAX_PACKED_ROW_TILE):
    """Largest valid packed-row tile; prefers >=2 grid steps (v7x 2-TC split)."""
    def valid(cand):
        if cand <= 0 or total_rows % cand or cand % rows_per_ray:
            return False
        if cand % 16 and cand != total_rows:          # bf16 sublane granularity
            return False
        rt = cand // rows_per_ray
        return rt % 8 == 0 or rt == n_rays

    start = min(max_tile, total_rows)
    start -= start % rows_per_ray
    best_single = None
    for cand in range(start, 0, -rows_per_ray):
        if not valid(cand):
            continue
        if best_single is None:
            best_single = cand
        if total_rows // cand >= 2:
            return cand
    return best_single if best_single is not None else total_rows


def nerf_pallas(pos_packed, dinit, dsk2, kparams, rows_per_ray):
    """pos_packed: (M/G, G*27) bf16; dinit: (N_rays, G*32) f32; dsk2: (N_rays, G*16) f32."""
    mp, pos_w = pos_packed.shape
    n_rays = dinit.shape[0]
    g_out = kparams["b_out"].shape[1]

    tile = _pick_packed_tile(mp, rows_per_ray, n_rays)
    ray_tile = tile // rows_per_ray
    assert mp % tile == 0
    assert (tile % 16 == 0) or tile == mp
    assert (ray_tile % 8 == 0) or ray_tile == n_rays
    grid = (mp // tile,)

    def row_spec(feat):
        return pl.BlockSpec((tile, feat), lambda i: (i, 0))

    def ray_spec(feat):
        return pl.BlockSpec((ray_tile, feat), lambda i: (i, 0))

    def resident_spec(shape):
        # Constant index_map -> parameter tile stays resident across grid steps.
        return pl.BlockSpec(shape, lambda i: (0,) * len(shape))

    pkeys = ("w_pos", "b_init", "w_hid", "b_hid", "w_sk1x", "b_sk1",
             "w_head", "b_sk2", "w_rgb", "b_out")
    pvals = [kparams[k] for k in pkeys]
    pspecs = [resident_spec(kparams[k].shape) for k in pkeys]

    return pl.pallas_call(
        nerf_mlp_kernel,
        out_shape=jax.ShapeDtypeStruct((mp, g_out), jnp.float32),
        grid=grid,
        in_specs=[row_spec(pos_w), ray_spec(dinit.shape[1]), ray_spec(dsk2.shape[1])]
                 + pspecs,
        out_specs=row_spec(g_out),
        compiler_params=pltpu.CompilerParams(
            dimension_semantics=("parallel",),
        ),
    )(pos_packed, dinit, dsk2, *pvals)


def prepare_kernel_params(params, g):
    """Block-diagonal (G-packed) weights / tiled biases; torch-layout (in, out)."""
    eye = jnp.eye(g, dtype=jnp.float32)
    bd = lambda w: jnp.kron(eye, w)                    # G-copy block diagonal
    tile_b = lambda b: jnp.tile(b, (1, g))

    w_init_p = params["w_init"][:POS_ENC]              # position half
    w_sk1_x = params["w_sk1"][:HIDDEN_DIM]
    w_sk1_p = params["w_sk1"][HIDDEN_DIM:]
    w_sk2_x = params["w_sk2"][:HIDDEN_DIM]

    # density weight scattered to output lane 4g, rgb to lanes 4g+1..4g+3.
    w_den_out = jnp.concatenate(
        [params["w_den"], jnp.zeros((HIDDEN_DIM, 3), jnp.float32)], axis=1)   # (32, 4)
    w_rgb_out = jnp.concatenate(
        [jnp.zeros((HALF_HIDDEN, 1), jnp.float32), params["w_rgb"]], axis=1)  # (16, 4)
    b_out = jnp.concatenate([params["b_den"], params["b_rgb"]], axis=1)       # (1, 4)

    kp = {
        "w_pos": jnp.concatenate([bd(w_init_p), bd(w_sk1_p)], axis=1),
        "b_init": tile_b(params["b_init"]),
        "w_hid": bd(params["w_hid"]),
        "b_hid": tile_b(params["b_hid"]),
        "w_sk1x": bd(w_sk1_x),
        "b_sk1": tile_b(params["b_sk1"]),
        "w_head": jnp.concatenate([bd(w_sk2_x), bd(w_den_out)], axis=1),
        "b_sk2": tile_b(params["b_sk2"]),
        "w_rgb": bd(w_rgb_out),
        "b_out": tile_b(b_out),
    }
    # Weights feed the MXU -> bf16; biases are added elementwise -> f32.
    return {k: (v.astype(MATMUL_DTYPE) if k.startswith("w_") else v.astype(jnp.float32))
            for k, v in kp.items()}


# ----------------------------- full forward ----------------------------------
def nerf_forward(ray_o, ray_d, params, pack=PACK):
    n_rays = ray_o.shape[0]
    g = max(pack, 1)
    while N_SAMPLES % g:
        g //= 2
    rows_per_ray = N_SAMPLES // g
    m = n_rays * N_SAMPLES

    samples = get_samples(ray_o, ray_d, STEP, N_SAMPLES)            # (N, S, 3)
    position = positional_encoding(samples, NUM_EMBEDDINGS)         # (N, S, 27) f32
    dir_enc = positional_encoding(ray_d, NUM_EMBEDDINGS)            # (N, 27)   f32

    # Tiny per-ray direction contributions (bf16 operands, f32 accumulation),
    # lane-tiled g times so they line up with the packed per-sample blocks.
    d16 = dir_enc.astype(MATMUL_DTYPE)
    dinit = jnp.dot(d16, params["w_init"][POS_ENC:].astype(MATMUL_DTYPE),
                    preferred_element_type=jnp.float32)             # (N, 32)
    dsk2 = jnp.dot(d16, params["w_sk2"][HIDDEN_DIM:].astype(MATMUL_DTYPE),
                   preferred_element_type=jnp.float32)              # (N, 16)
    dinit = jnp.tile(dinit, (1, g))                                 # (N, g*32)
    dsk2 = jnp.tile(dsk2, (1, g))                                   # (N, g*16)

    # Pack g consecutive samples per lane-row (free reshape, same HBM bytes).
    pos_packed = position.reshape(m // g, g * POS_ENC).astype(MATMUL_DTYPE)

    kparams = prepare_kernel_params(params, g)
    out = nerf_pallas(pos_packed, dinit, dsk2, kparams, rows_per_ray)  # (m/g, g*4)
    out = out.reshape(n_rays, N_SAMPLES, 4)
    return out[..., :1], out[..., 1:]


# ----------------------------- references ------------------------------------
def _linear(x, w, b, bf16):
    if bf16:
        return jnp.dot(x.astype(jnp.bfloat16), w.astype(jnp.bfloat16),
                       preferred_element_type=jnp.float32) + b
    return jnp.dot(x, w) + b


def nerf_forward_ref(ray_o, ray_d, params, bf16=True):
    """Pure-JAX reference mirroring the PyTorch module. bf16=True matches the
    kernel's bf16-operand / f32-accumulation policy; bf16=False is pure f32."""
    samples = get_samples(ray_o, ray_d, STEP, N_SAMPLES)
    position = positional_encoding(samples, NUM_EMBEDDINGS)
    direction = positional_encoding(ray_d, NUM_EMBEDDINGS)
    if bf16:
        position = position.astype(jnp.bfloat16).astype(jnp.float32)  # streamed as bf16
    direction = jnp.broadcast_to(
        direction[:, None, :], (ray_o.shape[0], N_SAMPLES, POS_ENC))
    x = jnp.concatenate([position, direction], axis=-1)
    x = jax.nn.relu(_linear(x, params["w_init"], params["b_init"], bf16))
    for i in range(5):
        x = jax.nn.relu(_linear(x, params["w_hid"], params["b_hid"], bf16))
        if i == 3:
            x = jnp.concatenate([x, position], axis=-1)
            x = jax.nn.relu(_linear(x, params["w_sk1"], params["b_sk1"], bf16))
    density = jax.nn.sigmoid(_linear(x, params["w_den"], params["b_den"], bf16))
    x = jnp.concatenate([x, direction], axis=-1)
    x = jax.nn.relu(_linear(x, params["w_sk2"], params["b_sk2"], bf16))
    rgb = jax.nn.sigmoid(_linear(x, params["w_rgb"], params["b_rgb"], bf16))
    return density, rgb


def init_params(key):
    """Deterministic init. Weights are stored as (in, out) = torch W.T."""
    dims = {
        "init": (INPUT_ENC, HIDDEN_DIM),
        "hid": (HIDDEN_DIM, HIDDEN_DIM),
        "sk1": (HIDDEN_DIM + POS_ENC, HIDDEN_DIM),
        "sk2": (HIDDEN_DIM + POS_ENC, HALF_HIDDEN),
        "rgb": (HALF_HIDDEN, 3),
        "den": (HIDDEN_DIM, 1),
    }
    params = {}
    for name, (din, dout) in dims.items():
        key, kw, kb = jax.random.split(key, 3)
        bound = 1.0 / jnp.sqrt(din)
        params[f"w_{name}"] = jax.random.uniform(
            kw, (din, dout), jnp.float32, -bound, bound)
        params[f"b_{name}"] = jax.random.uniform(
            kb, (1, dout), jnp.float32, -bound, bound)
    return params


if __name__ == "__main__":
    key = jax.random.PRNGKey(0)
    key, ko, kd, kp = jax.random.split(key, 4)

    ray_o = jax.random.normal(ko, (N_RAYS, 3), jnp.float32)
    ray_d = jax.random.normal(kd, (N_RAYS, 3), jnp.float32)
    ray_d = ray_d / jnp.linalg.norm(ray_d, axis=-1, keepdims=True)

    params = init_params(kp)

    fwd = jax.jit(functools.partial(nerf_forward, params=params))
    density, rgb = fwd(ray_o, ray_d)
    jax.block_until_ready((density, rgb))

    assert density.shape == (N_RAYS, N_SAMPLES, 1)
    assert rgb.shape == (N_RAYS, N_SAMPLES, 3)

    # Strict check against a reference with the same bf16 streaming/operand policy.
    d_ref, r_ref = nerf_forward_ref(ray_o, ray_d, params, bf16=True)
    assert jnp.allclose(density, d_ref, atol=5e-3, rtol=5e-3), float(
        jnp.max(jnp.abs(density - d_ref)))
    assert jnp.allclose(rgb, r_ref, atol=5e-3, rtol=5e-3), float(
        jnp.max(jnp.abs(rgb - r_ref)))

    # Looser sanity check against a pure-f32 reference (bounds the bf16 error).
    d32, r32 = nerf_forward_ref(ray_o, ray_d, params, bf16=False)
    assert jnp.allclose(density, d32, atol=3e-2), float(jnp.max(jnp.abs(density - d32)))
    assert jnp.allclose(rgb, r32, atol=3e-2), float(jnp.max(jnp.abs(rgb - r32)))

    print("KERNEL_OK")
</pallas_src>

<mosaic_0001>
module attributes {stable_mosaic.version = 11 : i64} {
  func.func @nerf_mlp_kernel(%arg0: i32, %arg1: memref<16x216xbf16, #tpu.memory_space<vmem>>, %arg2: memref<8x256xf32, #tpu.memory_space<vmem>>, %arg3: memref<8x128xf32, #tpu.memory_space<vmem>>, %arg4: memref<216x512xbf16, #tpu.memory_space<vmem>>, %arg5: memref<1x256xf32, #tpu.memory_space<vmem>>, %arg6: memref<256x256xbf16, #tpu.memory_space<vmem>>, %arg7: memref<1x256xf32, #tpu.memory_space<vmem>>, %arg8: memref<256x256xbf16, #tpu.memory_space<vmem>>, %arg9: memref<1x256xf32, #tpu.memory_space<vmem>>, %arg10: memref<256x160xbf16, #tpu.memory_space<vmem>>, %arg11: memref<1x128xf32, #tpu.memory_space<vmem>>, %arg12: memref<128x32xbf16, #tpu.memory_space<vmem>>, %arg13: memref<1x32xf32, #tpu.memory_space<vmem>>, %arg14: memref<16x32xf32, #tpu.memory_space<vmem>>) attributes {dimension_semantics = [#tpu.dimension_semantics<parallel>], iteration_bounds = array<i64: 1>, scalar_prefetch = 0 : i64, scratch_operands = 0 : i64, tpu.core_type = #tpu.core_type<tc>, window_params = [{transform_indices = @transform_0, window_bounds = array<i64: 16, 216>}, {transform_indices = @transform_1, window_bounds = array<i64: 8, 256>}, {transform_indices = @transform_2, window_bounds = array<i64: 8, 128>}, {pipeline_mode = #tpu.pipeline_mode<synchronous>, transform_indices = @transform_3, window_bounds = array<i64: 216, 512>}, {pipeline_mode = #tpu.pipeline_mode<synchronous>, transform_indices = @transform_4, window_bounds = array<i64: 1, 256>}, {pipeline_mode = #tpu.pipeline_mode<synchronous>, transform_indices = @transform_5, window_bounds = array<i64: 256, 256>}, {pipeline_mode = #tpu.pipeline_mode<synchronous>, transform_indices = @transform_6, window_bounds = array<i64: 1, 256>}, {pipeline_mode = #tpu.pipeline_mode<synchronous>, transform_indices = @transform_7, window_bounds = array<i64: 256, 256>}, {pipeline_mode = #tpu.pipeline_mode<synchronous>, transform_indices = @transform_8, window_bounds = array<i64: 1, 256>}, {pipeline_mode = #tpu.pipeline_mode<synchronous>, transform_indices = @transform_9, window_bounds = array<i64: 256, 160>}, {pipeline_mode = #tpu.pipeline_mode<synchronous>, transform_indices = @transform_10, window_bounds = array<i64: 1, 128>}, {pipeline_mode = #tpu.pipeline_mode<synchronous>, transform_indices = @transform_11, window_bounds = array<i64: 128, 32>}, {pipeline_mode = #tpu.pipeline_mode<synchronous>, transform_indices = @transform_12, window_bounds = array<i64: 1, 32>}, {transform_indices = @transform_13, window_bounds = array<i64: 16, 32>}]} {
    %c0 = arith.constant 0 : index
    %c0_0 = arith.constant 0 : index
    %0 = vector.load %arg5[%c0, %c0_0] : memref<1x256xf32, #tpu.memory_space<vmem>>, vector<1x256xf32>
    %1 = vector.shape_cast %0 : vector<1x256xf32> to vector<1x256xf32>
    %2 = vector.broadcast %1 : vector<1x256xf32> to vector<16x256xf32>
    %c0_1 = arith.constant 0 : index
    %c0_2 = arith.constant 0 : index
    %3 = vector.load %arg7[%c0_1, %c0_2] : memref<1x256xf32, #tpu.memory_space<vmem>>, vector<1x256xf32>
    %4 = vector.shape_cast %3 : vector<1x256xf32> to vector<1x256xf32>
    %5 = vector.broadcast %4 : vector<1x256xf32> to vector<16x256xf32>
    %c0_3 = arith.constant 0 : index
    %c0_4 = arith.constant 0 : index
    %6 = vector.load %arg9[%c0_3, %c0_4] : memref<1x256xf32, #tpu.memory_space<vmem>>, vector<1x256xf32>
    %7 = vector.shape_cast %6 : vector<1x256xf32> to vector<1x256xf32>
    %8 = vector.broadcast %7 : vector<1x256xf32> to vector<16x256xf32>
    %c0_5 = arith.constant 0 : index
    %c0_6 = arith.constant 0 : index
    %9 = vector.load %arg11[%c0_5, %c0_6] : memref<1x128xf32, #tpu.memory_space<vmem>>, vector<1x128xf32>
    %10 = vector.shape_cast %9 : vector<1x128xf32> to vector<1x128xf32>
    %11 = vector.broadcast %10 : vector<1x128xf32> to vector<16x128xf32>
    %c0_7 = arith.constant 0 : index
    %c0_8 = arith.constant 0 : index
    %12 = vector.load %arg13[%c0_7, %c0_8] : memref<1x32xf32, #tpu.memory_space<vmem>>, vector<1x32xf32>
    %13 = vector.shape_cast %12 : vector<1x32xf32> to vector<1x32xf32>
    %14 = vector.broadcast %13 : vector<1x32xf32> to vector<16x32xf32>
    %c0_9 = arith.constant 0 : index
    %c0_10 = arith.constant 0 : index
    %15 = vector.load %arg1[%c0_9, %c0_10] : memref<16x216xbf16, #tpu.memory_space<vmem>>, vector<16x216xbf16>
    %c0_11 = arith.constant 0 : index
    %c0_12 = arith.constant 0 : index
    %16 = vector.load %arg4[%c0_11, %c0_12] : memref<216x512xbf16, #tpu.memory_space<vmem>>, vector<216x512xbf16>
    %cst = arith.constant dense<0.000000e+00> : vector<16x512xf32>
    %17 = tpu.matmul %15, %16, %cst {dimension_numbers = #tpu.dot_dimension_numbers<[1], [0], [0], [1], [0, 0, 1, 1], [], []>} : vector<16x216xbf16>, vector<216x512xbf16>, vector<16x512xf32> -> vector<16x512xf32>
    %18 = vector.extract_strided_slice %17 {offsets = [0, 0], sizes = [16, 256], strides = [1, 1]} : vector<16x512xf32> to vector<16x256xf32>
    %19 = vector.extract_strided_slice %17 {offsets = [0, 256], sizes = [16, 256], strides = [1, 1]} : vector<16x512xf32> to vector<16x256xf32>
    %c0_13 = arith.constant 0 : index
    %c0_14 = arith.constant 0 : index
    %20 = vector.load %arg2[%c0_13, %c0_14] : memref<8x256xf32, #tpu.memory_space<vmem>>, vector<8x256xf32>
    %21 = vector.shape_cast %20 : vector<8x256xf32> to vector<8x1x256xf32>
    %22 = vector.shape_cast %21 : vector<8x1x256xf32> to vector<8x1x256xf32>
    %23 = vector.broadcast %22 : vector<8x1x256xf32> to vector<8x2x256xf32>
    %24 = vector.shape_cast %23 : vector<8x2x256xf32> to vector<16x256xf32>
    %25 = arith.addf %18, %24 : vector<16x256xf32>
    %26 = arith.addf %25, %2 : vector<16x256xf32>
    %cst_15 = arith.constant 0.000000e+00 : f32
    %27 = vector.broadcast %cst_15 : f32 to vector<16x256xf32>
    %28 = arith.maximumf %26, %27 : vector<16x256xf32>
    %29 = arith.truncf %28 : vector<16x256xf32> to vector<16x256xbf16>
    %c0_16 = arith.constant 0 : index
    %c0_17 = arith.constant 0 : index
    %30 = vector.load %arg6[%c0_16, %c0_17] : memref<256x256xbf16, #tpu.memory_space<vmem>>, vector<256x256xbf16>
    %cst_18 = arith.constant dense<0.000000e+00> : vector<16x256xf32>
    %31 = tpu.matmul %29, %30, %cst_18 {dimension_numbers = #tpu.dot_dimension_numbers<[1], [0], [0], [1], [0, 0, 1, 1], [], []>} : vector<16x256xbf16>, vector<256x256xbf16>, vector<16x256xf32> -> vector<16x256xf32>
    %32 = arith.addf %31, %5 : vector<16x256xf32>
    %cst_19 = arith.constant 0.000000e+00 : f32
    %33 = vector.broadcast %cst_19 : f32 to vector<16x256xf32>
    %34 = arith.maximumf %32, %33 : vector<16x256xf32>
    %35 = arith.truncf %34 : vector<16x256xf32> to vector<16x256xbf16>
    %c0_20 = arith.constant 0 : index
    %c0_21 = arith.constant 0 : index
    %36 = vector.load %arg6[%c0_20, %c0_21] : memref<256x256xbf16, #tpu.memory_space<vmem>>, vector<256x256xbf16>
    %cst_22 = arith.constant dense<0.000000e+00> : vector<16x256xf32>
    %37 = tpu.matmul %35, %36, %cst_22 {dimension_numbers = #tpu.dot_dimension_numbers<[1], [0], [0], [1], [0, 0, 1, 1], [], []>} : vector<16x256xbf16>, vector<256x256xbf16>, vector<16x256xf32> -> vector<16x256xf32>
    %38 = arith.addf %37, %5 : vector<16x256xf32>
    %cst_23 = arith.constant 0.000000e+00 : f32
    %39 = vector.broadcast %cst_23 : f32 to vector<16x256xf32>
    %40 = arith.maximumf %38, %39 : vector<16x256xf32>
    %41 = arith.truncf %40 : vector<16x256xf32> to vector<16x256xbf16>
    %c0_24 = arith.constant 0 : index
    %c0_25 = arith.constant 0 : index
    %42 = vector.load %arg6[%c0_24, %c0_25] : memref<256x256xbf16, #tpu.memory_space<vmem>>, vector<256x256xbf16>
    %cst_26 = arith.constant dense<0.000000e+00> : vector<16x256xf32>
    %43 = tpu.matmul %41, %42, %cst_26 {dimension_numbers = #tpu.dot_dimension_numbers<[1], [0], [0], [1], [0, 0, 1, 1], [], []>} : vector<16x256xbf16>, vector<256x256xbf16>, vector<16x256xf32> -> vector<16x256xf32>
    %44 = arith.addf %43, %5 : vector<16x256xf32>
    %cst_27 = arith.constant 0.000000e+00 : f32
    %45 = vector.broadcast %cst_27 : f32 to vector<16x256xf32>
    %46 = arith.maximumf %44, %45 : vector<16x256xf32>
    %47 = arith.truncf %46 : vector<16x256xf32> to vector<16x256xbf16>
    %c0_28 = arith.constant 0 : index
    %c0_29 = arith.constant 0 : index
    %48 = vector.load %arg6[%c0_28, %c0_29] : memref<256x256xbf16, #tpu.memory_space<vmem>>, vector<256x256xbf16>
    %cst_30 = arith.constant dense<0.000000e+00> : vector<16x256xf32>
    %49 = tpu.matmul %47, %48, %cst_30 {dimension_numbers = #tpu.dot_dimension_numbers<[1], [0], [0], [1], [0, 0, 1, 1], [], []>} : vector<16x256xbf16>, vector<256x256xbf16>, vector<16x256xf32> -> vector<16x256xf32>
    %50 = arith.addf %49, %5 : vector<16x256xf32>
    %cst_31 = arith.constant 0.000000e+00 : f32
    %51 = vector.broadcast %cst_31 : f32 to vector<16x256xf32>
    %52 = arith.maximumf %50, %51 : vector<16x256xf32>
    %53 = arith.truncf %52 : vector<16x256xf32> to vector<16x256xbf16>
    %c0_32 = arith.constant 0 : index
    %c0_33 = arith.constant 0 : index
    %54 = vector.load %arg8[%c0_32, %c0_33] : memref<256x256xbf16, #tpu.memory_space<vmem>>, vector<256x256xbf16>
    %cst_34 = arith.constant dense<0.000000e+00> : vector<16x256xf32>
    %55 = tpu.matmul %53, %54, %cst_34 {dimension_numbers = #tpu.dot_dimension_numbers<[1], [0], [0], [1], [0, 0, 1, 1], [], []>} : vector<16x256xbf16>, vector<256x256xbf16>, vector<16x256xf32> -> vector<16x256xf32>
    %56 = arith.addf %55, %19 : vector<16x256xf32>
    %57 = arith.addf %56, %8 : vector<16x256xf32>
    %cst_35 = arith.constant 0.000000e+00 : f32
    %58 = vector.broadcast %cst_35 : f32 to vector<16x256xf32>
    %59 = arith.maximumf %57, %58 : vector<16x256xf32>
    %60 = arith.truncf %59 : vector<16x256xf32> to vector<16x256xbf16>
    %c0_36 = arith.constant 0 : index
    %c0_37 = arith.constant 0 : index
    %61 = vector.load %arg6[%c0_36, %c0_37] : memref<256x256xbf16, #tpu.memory_space<vmem>>, vector<256x256xbf16>
    %cst_38 = arith.constant dense<0.000000e+00> : vector<16x256xf32>
    %62 = tpu.matmul %60, %61, %cst_38 {dimension_numbers = #tpu.dot_dimension_numbers<[1], [0], [0], [1], [0, 0, 1, 1], [], []>} : vector<16x256xbf16>, vector<256x256xbf16>, vector<16x256xf32> -> vector<16x256xf32>
    %63 = arith.addf %62, %5 : vector<16x256xf32>
    %cst_39 = arith.constant 0.000000e+00 : f32
    %64 = vector.broadcast %cst_39 : f32 to vector<16x256xf32>
    %65 = arith.maximumf %63, %64 : vector<16x256xf32>
    %66 = arith.truncf %65 : vector<16x256xf32> to vector<16x256xbf16>
    %c0_40 = arith.constant 0 : index
    %c0_41 = arith.constant 0 : index
    %67 = vector.load %arg10[%c0_40, %c0_41] : memref<256x160xbf16, #tpu.memory_space<vmem>>, vector<256x160xbf16>
    %cst_42 = arith.constant dense<0.000000e+00> : vector<16x160xf32>
    %68 = tpu.matmul %66, %67, %cst_42 {dimension_numbers = #tpu.dot_dimension_numbers<[1], [0], [0], [1], [0, 0, 1, 1], [], []>} : vector<16x256xbf16>, vector<256x160xbf16>, vector<16x160xf32> -> vector<16x160xf32>
    %69 = vector.extract_strided_slice %68 {offsets = [0, 0], sizes = [16, 128], strides = [1, 1]} : vector<16x160xf32> to vector<16x128xf32>
    %c0_43 = arith.constant 0 : index
    %c0_44 = arith.constant 0 : index
    %70 = vector.load %arg3[%c0_43, %c0_44] : memref<8x128xf32, #tpu.memory_space<vmem>>, vector<8x128xf32>
    %71 = vector.shape_cast %70 : vector<8x128xf32> to vector<8x1x128xf32>
    %72 = vector.shape_cast %71 : vector<8x1x128xf32> to vector<8x1x128xf32>
    %73 = vector.broadcast %72 : vector<8x1x128xf32> to vector<8x2x128xf32>
    %74 = vector.shape_cast %73 : vector<8x2x128xf32> to vector<16x128xf32>
    %75 = arith.addf %69, %74 : vector<16x128xf32>
    %76 = arith.addf %75, %11 : vector<16x128xf32>
    %cst_45 = arith.constant 0.000000e+00 : f32
    %77 = vector.broadcast %cst_45 : f32 to vector<16x128xf32>
    %78 = arith.maximumf %76, %77 : vector<16x128xf32>
    %79 = vector.extract_strided_slice %68 {offsets = [0, 128], sizes = [16, 32], strides = [1, 1]} : vector<16x160xf32> to vector<16x32xf32>
    %80 = arith.truncf %78 : vector<16x128xf32> to vector<16x128xbf16>
    %c0_46 = arith.constant 0 : index
    %c0_47 = arith.constant 0 : index
    %81 = vector.load %arg12[%c0_46, %c0_47] : memref<128x32xbf16, #tpu.memory_space<vmem>>, vector<128x32xbf16>
    %cst_48 = arith.constant dense<0.000000e+00> : vector<16x32xf32>
    %82 = tpu.matmul %80, %81, %cst_48 {dimension_numbers = #tpu.dot_dimension_numbers<[1], [0], [0], [1], [0, 0, 1, 1], [], []>} : vector<16x128xbf16>, vector<128x32xbf16>, vector<16x32xf32> -> vector<16x32xf32>
    %83 = arith.addf %79, %82 : vector<16x32xf32>
    %84 = arith.addf %83, %14 : vector<16x32xf32>
    %85 = arith.negf %84 : vector<16x32xf32>
    %86 = math.exp %85 : vector<16x32xf32>
    %cst_49 = arith.constant 1.000000e+00 : f32
    %87 = vector.broadcast %cst_49 : f32 to vector<16x32xf32>
    %88 = arith.addf %87, %86 : vector<16x32xf32>
    %89 = arith.divf %87, %88 : vector<16x32xf32>
    %c0_50 = arith.constant 0 : index
    %c0_51 = arith.constant 0 : index
    %90 = vector.load %arg14[%c0_50, %c0_51] : memref<16x32xf32, #tpu.memory_space<vmem>>, vector<16x32xf32>
    tpu.vector_store %arg14[%c0_50, %c0_51], %89 {strides = array<i32>} : memref<16x32xf32, #tpu.memory_space<vmem>>, vector<16x32xf32>,
    return
  }
  func.func @transform_0(%arg0: i32) -> (i32, i32) {
    %c0_i32 = arith.constant 0 : i32
    %c0_i32_0 = arith.constant 0 : i32
    return %arg0, %c0_i32 : i32, i32
  }
  func.func @transform_1(%arg0: i32) -> (i32, i32) {
    %c0_i32 = arith.constant 0 : i32
    %c0_i32_0 = arith.constant 0 : i32
    return %arg0, %c0_i32 : i32, i32
  }
  func.func @transform_2(%arg0: i32) -> (i32, i32) {
    %c0_i32 = arith.constant 0 : i32
    %c0_i32_0 = arith.constant 0 : i32
    return %arg0, %c0_i32 : i32, i32
  }
  func.func @transform_3(%arg0: i32) -> (i32, i32) {
    %c0_i32 = arith.constant 0 : i32
    %c0_i32_0 = arith.constant 0 : i32
    %c0_i32_1 = arith.constant 0 : i32
    return %c0_i32, %c0_i32_0 : i32, i32
  }
  func.func @transform_4(%arg0: i32) -> (i32, i32) {
    %c0_i32 = arith.constant 0 : i32
    %c0_i32_0 = arith.constant 0 : i32
    %c0_i32_1 = arith.constant 0 : i32
    return %c0_i32, %c0_i32_0 : i32, i32
  }
  func.func @transform_5(%arg0: i32) -> (i32, i32) {
    %c0_i32 = arith.constant 0 : i32
    %c0_i32_0 = arith.constant 0 : i32
    %c0_i32_1 = arith.constant 0 : i32
    return %c0_i32, %c0_i32_0 : i32, i32
  }
  func.func @transform_6(%arg0: i32) -> (i32, i32) {
    %c0_i32 = arith.constant 0 : i32
    %c0_i32_0 = arith.constant 0 : i32
    %c0_i32_1 = arith.constant 0 : i32
    return %c0_i32, %c0_i32_0 : i32, i32
  }
  func.func @transform_7(%arg0: i32) -> (i32, i32) {
    %c0_i32 = arith.constant 0 : i32
    %c0_i32_0 = arith.constant 0 : i32
    %c0_i32_1 = arith.constant 0 : i32
    return %c0_i32, %c0_i32_0 : i32, i32
  }
  func.func @transform_8(%arg0: i32) -> (i32, i32) {
    %c0_i32 = arith.constant 0 : i32
    %c0_i32_0 = arith.constant 0 : i32
    %c0_i32_1 = arith.constant 0 : i32
    return %c0_i32, %c0_i32_0 : i32, i32
  }
  func.func @transform_9(%arg0: i32) -> (i32, i32) {
    %c0_i32 = arith.constant 0 : i32
    %c0_i32_0 = arith.constant 0 : i32
    %c0_i32_1 = arith.constant 0 : i32
    return %c0_i32, %c0_i32_0 : i32, i32
  }
  func.func @transform_10(%arg0: i32) -> (i32, i32) {
    %c0_i32 = arith.constant 0 : i32
    %c0_i32_0 = arith.constant 0 : i32
    %c0_i32_1 = arith.constant 0 : i32
    return %c0_i32, %c0_i32_0 : i32, i32
  }
  func.func @transform_11(%arg0: i32) -> (i32, i32) {
    %c0_i32 = arith.constant 0 : i32
    %c0_i32_0 = arith.constant 0 : i32
    %c0_i32_1 = arith.constant 0 : i32
    return %c0_i32, %c0_i32_0 : i32, i32
  }
  func.func @transform_12(%arg0: i32) -> (i32, i32) {
    %c0_i32 = arith.constant 0 : i32
    %c0_i32_0 = arith.constant 0 : i32
    %c0_i32_1 = arith.constant 0 : i32
    return %c0_i32, %c0_i32_0 : i32, i32
  }
  func.func @transform_13(%arg0: i32) -> (i32, i32) {
    %c0_i32 = arith.constant 0 : i32
    %c0_i32_0 = arith.constant 0 : i32
    return %arg0, %c0_i32 : i32, i32
  }
}

</mosaic_0001>

<llo_original>
// kernel: tile.34
$region0: #{tile.34}
  %s0 = inlined_call_operand.vmem [shape: f32[8,8,32], index: 0, kind: input, shape index: {}]
  %s1 = inlined_call_operand.vmem [shape: f32[8,256], index: 1, kind: output, shape index: {}]
  %v2 = vld [vmem:[%s0] ss:$4 sm:$0xff]
  %vm3 = vcmask 261120
  %4 = vst.msk [vmem:[%s1] ss:$8 sm:$0x3] %vm3, %v2
  %s5 = scalar_lea.vmem %s1, 4294967281
  %6 = vst.msk [vmem:[%s5] ss:$8 sm:$0xc] %vm3, %v2
  %s7 = scalar_lea.vmem %s1, 4294967266
  %8 = vst.msk [vmem:[%s7] ss:$8 sm:$0x30] %vm3, %v2
  %s9 = scalar_lea.vmem %s1, 4294967251
  %10 = vst.msk [vmem:[%s9] ss:$8 sm:$0xc0] %vm3, %v2
  %s11 = scalar_lea.vmem %s0, 32
  %v12 = vld [vmem:[%s11] ss:$4 sm:$0xff]
  %vm13 = vcmask 261120
  %s14 = scalar_lea.vmem %s1, 4
  %15 = vst.msk [vmem:[%s14] ss:$8 sm:$0x3] %vm13, %v12
  %s16 = scalar_lea.vmem %s1, 4294967285
  %17 = vst.msk [vmem:[%s16] ss:$8 sm:$0xc] %vm13, %v12
  %s18 = scalar_lea.vmem %s1, 4294967270
  %19 = vst.msk [vmem:[%s18] ss:$8 sm:$0x30] %vm13, %v12
  %s20 = scalar_lea.vmem %s1, 4294967255
  %21 = vst.msk [vmem:[%s20] ss:$8 sm:$0xc0] %vm13, %v12
  %s22 = scalar_lea.vmem %s0, 3
  %v23 = vld [vmem:[%s22] ss:$8 sm:$0xf]
  %s24 = scalar_lea.vmem %s0, 3
  %v25 = vld [vmem:[%s24] ss:$8 sm:$0xf0]
  %vm26 = vcmask 1047556
  %v27 = vsel %vm26, %v25, %v23
  %28 = vrot.lane.b32.xlu0 %v27, 96
  %v29 = vpop.permute.xlu0 %28
  %vm30 = vcmask 1048320
  %31 = vst.msk [vmem:[%s1] sm:$0xff] %vm30, %v29
  %s32 = scalar_lea.vmem %s0, 7
  %v33 = vld [vmem:[%s32] ss:$8 sm:$0xf]
  %s34 = scalar_lea.vmem %s0, 7
  %v35 = vld [vmem:[%s34] ss:$8 sm:$0xf0]
  %vm36 = vcmask 1047556
  %v37 = vsel %vm36, %v35, %v33
  %38 = vrot.lane.b32.xlu0 %v37, 96
  %v39 = vpop.permute.xlu0 %38
  %vm40 = vcmask 1048320
  %s41 = scalar_lea.vmem %s1, 8
  %42 = vst.msk [vmem:[%s41] sm:$0xff] %vm40, %v39
  %s43 = scalar_lea.vmem %s0, 2
  %v44 = vld [vmem:[%s43] ss:$8 sm:$0xf]
  %s45 = scalar_lea.vmem %s0, 2
  %v46 = vld [vmem:[%s45] ss:$8 sm:$0xf0]
  %vm47 = vcmask 1047556
  %v48 = vsel %vm47, %v46, %v44
  %49 = vrot.lane.b32.xlu0 %v48, 64
  %v50 = vpop.permute.xlu0 %49
  %vm51 = vcmask 785920
  %52 = vst.msk [vmem:[%s1] sm:$0xff] %vm51, %v50
  %s53 = scalar_lea.vmem %s0, 6
  %v54 = vld [vmem:[%s53] ss:$8 sm:$0xf]
  %s55 = scalar_lea.vmem %s0, 6
  %v56 = vld [vmem:[%s55] ss:$8 sm:$0xf0]
  %vm57 = vcmask 1047556
  %v58 = vsel %vm57, %v56, %v54
  %59 = vrot.lane.b32.xlu0 %v58, 64
  %v60 = vpop.permute.xlu0 %59
  %vm61 = vcmask 785920
  %s62 = scalar_lea.vmem %s1, 8
  %63 = vst.msk [vmem:[%s62] sm:$0xff] %vm61, %v60
  %s64 = scalar_lea.vmem %s0, 1
  %v65 = vld [vmem:[%s64] ss:$8 sm:$0xf]
  %s66 = scalar_lea.vmem %s0, 1
  %v67 = vld [vmem:[%s66] ss:$8 sm:$0xf0]
  %vm68 = vcmask 1047556
  %v69 = vsel %vm68, %v67, %v65
  %70 = vrot.lane.b32.xlu0 %v69, 32
  %v71 = vpop.permute.xlu0 %70
  %vm72 = vcmask 523520
  %73 = vst.msk [vmem:[%s1] sm:$0xff] %vm72, %v71
  %s74 = scalar_lea.vmem %s0, 5
  %v75 = vld [vmem:[%s74] ss:$8 sm:$0xf]
  %s76 = scalar_lea.vmem %s0, 5
  %v77 = vld [vmem:[%s76] ss:$8 sm:$0xf0]
  %vm78 = vcmask 1047556
  %v79 = vsel %vm78, %v77, %v75
  %80 = vrot.lane.b32.xlu0 %v79, 32
  %v81 = vpop.permute.xlu0 %80
  %vm82 = vcmask 523520
  %s83 = scalar_lea.vmem %s1, 8
  %84 = vst.msk [vmem:[%s83] sm:$0xff] %vm82, %v81

// kernel: tile.39
$region0: #{tile.39}
  %s0 = inlined_call_operand.vmem [shape: f32[8,8,16], index: 0, kind: input, shape index: {}]
  %s1 = inlined_call_operand.vmem [shape: f32[8,128], index: 1, kind: output, shape index: {}]
  %v2 = vld [vmem:[%s0] ss:$8 sm:$0xf]
  %v3 = vld [vmem:[%s0] ss:$8 sm:$0xf0]
  %vm4 = vcmask 1047556
  %v5 = vsel %vm4, %v3, %v2
  %vm6 = vcmask 130048
  %7 = vst.msk [vmem:[%s1] sm:$0xff] %vm6, %v5
  %s8 = scalar_lea.vmem %s0, 7
  %v9 = vld [vmem:[%s8] ss:$8 sm:$0xf]
  %s10 = scalar_lea.vmem %s0, 7
  %v11 = vld [vmem:[%s10] ss:$8 sm:$0xf0]
  %vm12 = vcmask 1047556
  %v13 = vsel %vm12, %v11, %v9
  %14 = vrot.lane.b32.xlu0 %v13, 112
  %v15 = vpop.permute.xlu0 %14
  %vm16 = vcmask 1048448
  %17 = vst.msk [vmem:[%s1] sm:$0xff] %vm16, %v15
  %s18 = scalar_lea.vmem %s0, 6
  %v19 = vld [vmem:[%s18] ss:$8 sm:$0xf]
  %s20 = scalar_lea.vmem %s0, 6
  %v21 = vld [vmem:[%s20] ss:$8 sm:$0xf0]
  %vm22 = vcmask 1047556
  %v23 = vsel %vm22, %v21, %v19
  %24 = vrot.lane.b32.xlu0 %v23, 96
  %v25 = vpop.permute.xlu0 %24
  %vm26 = vcmask 917248
  %27 = vst.msk [vmem:[%s1] sm:$0xff] %vm26, %v25
  %s28 = scalar_lea.vmem %s0, 5
  %v29 = vld [vmem:[%s28] ss:$8 sm:$0xf]
  %s30 = scalar_lea.vmem %s0, 5
  %v31 = vld [vmem:[%s30] ss:$8 sm:$0xf0]
  %vm32 = vcmask 1047556
  %v33 = vsel %vm32, %v31, %v29
  %34 = vrot.lane.b32.xlu0 %v33, 80
  %v35 = vpop.permute.xlu0 %34
  %vm36 = vcmask 786048
  %37 = vst.msk [vmem:[%s1] sm:$0xff] %vm36, %v35
  %s38 = scalar_lea.vmem %s0, 4
  %v39 = vld [vmem:[%s38] ss:$8 sm:$0xf]
  %s40 = scalar_lea.vmem %s0, 4
  %v41 = vld [vmem:[%s40] ss:$8 sm:$0xf0]
  %vm42 = vcmask 1047556
  %v43 = vsel %vm42, %v41, %v39
  %44 = vrot.lane.b32.xlu0 %v43, 64
  %v45 = vpop.permute.xlu0 %44
  %vm46 = vcmask 654848
  %47 = vst.msk [vmem:[%s1] sm:$0xff] %vm46, %v45
  %s48 = scalar_lea.vmem %s0, 3
  %v49 = vld [vmem:[%s48] ss:$8 sm:$0xf]
  %s50 = scalar_lea.vmem %s0, 3
  %v51 = vld [vmem:[%s50] ss:$8 sm:$0xf0]
  %vm52 = vcmask 1047556
  %v53 = vsel %vm52, %v51, %v49
  %54 = vrot.lane.b32.xlu0 %v53, 48
  %v55 = vpop.permute.xlu0 %54
  %vm56 = vcmask 523648
  %57 = vst.msk [vmem:[%s1] sm:$0xff] %vm56, %v55
  %s58 = scalar_lea.vmem %s0, 2
  %v59 = vld [vmem:[%s58] ss:$8 sm:$0xf]
  %s60 = scalar_lea.vmem %s0, 2
  %v61 = vld [vmem:[%s60] ss:$8 sm:$0xf0]
  %vm62 = vcmask 1047556
  %v63 = vsel %vm62, %v61, %v59
  %64 = vrot.lane.b32.xlu0 %v63, 32
  %v65 = vpop.permute.xlu0 %64
  %vm66 = vcmask 392448
  %67 = vst.msk [vmem:[%s1] sm:$0xff] %vm66, %v65
  %s68 = scalar_lea.vmem %s0, 1
  %v69 = vld [vmem:[%s68] ss:$8 sm:$0xf]
  %s70 = scalar_lea.vmem %s0, 1
  %v71 = vld [vmem:[%s70] ss:$8 sm:$0xf0]
  %vm72 = vcmask 1047556
  %v73 = vsel %vm72, %v71, %v69
  %74 = vrot.lane.b32.xlu0 %v73, 16
  %v75 = vpop.permute.xlu0 %74
  %vm76 = vcmask 261248
  %77 = vst.msk [vmem:[%s1] sm:$0xff] %vm76, %v75

// kernel: nerf_forward.1
$region0: #{nerf_forward.1}
  #allocation0 [shape = 'u32[]', space=smem, size = 0x4, offset = 0x4, fixed_abs, tag = 'smem constant byte address 0x4 - core index']
  #allocation1 [shape = 'u32[144,128]{1,0:T(1,128)}', space=vmem, size = 0x12000, scoped, tag = 'internal scratch']
  %s0 = inlined_call_operand.vmem [shape: bf16[16,216], index: 0, kind: input, shape index: {}]
  %s1 = inlined_call_operand.vmem [shape: f32[8,256], index: 1, kind: input, shape index: {}]
  %s2 = inlined_call_operand.vmem [shape: f32[8,128], index: 2, kind: input, shape index: {}]
  %s3 = inlined_call_operand.vmem [shape: bf16[216,512], index: 3, kind: input, shape index: {}]
  %s4 = inlined_call_operand.vmem [shape: f32[1,256], index: 4, kind: input, shape index: {}]
  %s5 = inlined_call_operand.vmem [shape: bf16[256,256], index: 5, kind: input, shape index: {}]
  %s6 = inlined_call_operand.vmem [shape: f32[1,256], index: 6, kind: input, shape index: {}]
  %s7 = inlined_call_operand.vmem [shape: bf16[256,256], index: 7, kind: input, shape index: {}]
  %s8 = inlined_call_operand.vmem [shape: f32[1,256], index: 8, kind: input, shape index: {}]
  %s9 = inlined_call_operand.vmem [shape: bf16[256,160], index: 9, kind: input, shape index: {}]
  %s10 = inlined_call_operand.vmem [shape: f32[1,128], index: 10, kind: input, shape index: {}]
  %s11 = inlined_call_operand.vmem [shape: bf16[128,32], index: 11, kind: input, shape index: {}]
  %s12 = inlined_call_operand.vmem [shape: f32[1,32], index: 12, kind: input, shape index: {}]
  %s13 = inlined_call_operand.vmem [shape: f32[16,32], index: 13, kind: output, shape index: {}]
  %s14 = sld [smem:[#allocation0]]
  $region62: #{nerf_forward.1} parent=0
    _
  %s16 = ssub.s32 1, %s14
  %s17 = scalar_select 0, %s16, %s14
  // Predicated region
  $region2: #{nerf_forward.1} parent=0 // pred_check
    _
  $region3: #{nerf_forward.1} parent=0 // pred_check_branch
    %19 = sbr.rel (0) target = $region5
  $region4: #{nerf_forward.1} parent=0 // pred_region
    _
  $region5: #{nerf_forward.1} parent=0 // pred_fallthru
    _
  // Predicated region
  $region6: #{nerf_forward.1} parent=0 // pred_check
    _
  $region7: #{nerf_forward.1} parent=0 // pred_check_branch
    %21 = sbr.rel (0) target = $region9
  $region8: #{nerf_forward.1} parent=0 // pred_region
    _
  $region9: #{nerf_forward.1} parent=0 // pred_fallthru
    _
  // Predicated region
  $region10: #{nerf_forward.1} parent=0 // pred_check
    _
  $region11: #{nerf_forward.1} parent=0 // pred_check_branch
    %23 = sbr.rel (0) target = $region13
  $region12: #{nerf_forward.1} parent=0 // pred_region
    _
  $region13: #{nerf_forward.1} parent=0 // pred_fallthru
    _
  // Predicated region
  $region14: #{nerf_forward.1} parent=0 // pred_check
    _
  $region15: #{nerf_forward.1} parent=0 // pred_check_branch
    %25 = sbr.rel (0) target = $region17
  $region16: #{nerf_forward.1} parent=0 // pred_region
    _
  $region17: #{nerf_forward.1} parent=0 // pred_fallthru
    _
  // Predicated region
  $region18: #{nerf_forward.1} parent=0 // pred_check
    _
  $region19: #{nerf_forward.1} parent=0 // pred_check_branch
    %27 = sbr.rel (0) target = $region21
  $region20: #{nerf_forward.1} parent=0 // pred_region
    _
  $region21: #{nerf_forward.1} parent=0 // pred_fallthru
    _
  // Predicated region
  $region22: #{nerf_forward.1} parent=0 // pred_check
    _
  $region23: #{nerf_forward.1} parent=0 // pred_check_branch
    %29 = sbr.rel (0) target = $region25
  $region24: #{nerf_forward.1} parent=0 // pred_region
    _
  $region25: #{nerf_forward.1} parent=0 // pred_fallthru
    _
  // Predicated region
  $region26: #{nerf_forward.1} parent=0 // pred_check
    _
  $region27: #{nerf_forward.1} parent=0 // pred_check_branch
    %31 = sbr.rel (0) target = $region29
  $region28: #{nerf_forward.1} parent=0 // pred_region
    _
  $region29: #{nerf_forward.1} parent=0 // pred_fallthru
    _
  // Predicated region
  $region30: #{nerf_forward.1} parent=0 // pred_check
    _
  $region31: #{nerf_forward.1} parent=0 // pred_check_branch
    %33 = sbr.rel (0) target = $region33
  $region32: #{nerf_forward.1} parent=0 // pred_region
    _
  $region33: #{nerf_forward.1} parent=0 // pred_fallthru
    _
  // Predicated region
  $region34: #{nerf_forward.1} parent=0 // pred_check
    _
  $region35: #{nerf_forward.1} parent=0 // pred_check_branch
    %35 = sbr.rel (0) target = $region37
  $region36: #{nerf_forward.1} parent=0 // pred_region
    _
  $region37: #{nerf_forward.1} parent=0 // pred_fallthru
    _
  // Predicated region
  $region38: #{nerf_forward.1} parent=0 // pred_check
    _
  $region39: #{nerf_forward.1} parent=0 // pred_check_branch
    %37 = sbr.rel (0) target = $region41
  $region40: #{nerf_forward.1} parent=0 // pred_region
    _
  $region41: #{nerf_forward.1} parent=0 // pred_fallthru
    _
  // Predicated region
  $region42: #{nerf_forward.1} parent=0 // pred_check
    _
  $region43: #{nerf_forward.1} parent=0 // pred_check_branch
    %39 = sbr.rel (0) target = $region45
  $region44: #{nerf_forward.1} parent=0 // pred_region
    _
  $region45: #{nerf_forward.1} parent=0 // pred_fallthru
    _
  // Predicated region
  $region46: #{nerf_forward.1} parent=0 // pred_check
    _
  $region47: #{nerf_forward.1} parent=0 // pred_check_branch
    %41 = sbr.rel (0) target = $region49
  $region48: #{nerf_forward.1} parent=0 // pred_region
    _
  $region49: #{nerf_forward.1} parent=0 // pred_fallthru
    _
  // Predicated region
  $region50: #{nerf_forward.1} parent=0 // pred_check
    _
  $region51: #{nerf_forward.1} parent=0 // pred_check_branch
    %43 = sbr.rel (0) target = $region53
  $region52: #{nerf_forward.1} parent=0 // pred_region
    _
  $region53: #{nerf_forward.1} parent=0 // pred_fallthru
    _
  %v45 = vld [vmem:[%s4] sm:$0x3]
  %v47 = vlaneseq
  %v48 = vshrl.u32 %v47, 7
  %v49 = vsub.s32 0, %v48
  %v50 = vrot.slane %v45, %v49
  %v51 = vlaneseq
  %v52 = vshrl.u32 %v51, 7
  %v53 = vsub.s32 1, %v52
  %v54 = vrot.slane %v45, %v53
  %v57 = vld [vmem:[%s6] sm:$0x3]
  %v59 = vlaneseq
  %v60 = vshrl.u32 %v59, 7
  %v61 = vsub.s32 0, %v60
  %v62 = vrot.slane %v57, %v61
  %v63 = vlaneseq
  %v64 = vshrl.u32 %v63, 7
  %v65 = vsub.s32 1, %v64
  %v66 = vrot.slane %v57, %v65
  %v69 = vld [vmem:[%s8] sm:$0x3]
  %v71 = vlaneseq
  %v72 = vshrl.u32 %v71, 7
  %v73 = vsub.s32 0, %v72
  %v74 = vrot.slane %v69, %v73
  %v75 = vlaneseq
  %v76 = vshrl.u32 %v75, 7
  %v77 = vsub.s32 1, %v76
  %v78 = vrot.slane %v69, %v77
  %v81 = vld [vmem:[%s10] sm:$0x1]
  %v83 = vlaneseq
  %v84 = vshrl.u32 %v83, 7
  %v85 = vsub.s32 0, %v84
  %v86 = vrot.slane %v81, %v85
  %v88 = vld [vmem:[%s12] sm:$0x1]
  %v90 = vlaneseq
  %v91 = vshrl.u32 %v90, 7
  %v92 = vsub.s32 0, %v91
  %v93 = vrot.slane %v88, %v92
  %v95 = vld [vmem:[%s0] sm:$0xff]
  %v96 = vld [vmem:[%s0 + $0x8] sm:$0xff]
  %v97 = vld [vmem:[%s3] sm:$0xff]
  %v98 = vld [vmem:[%s3 + $0x8] sm:$0xff]
  %v99 = vld [vmem:[%s3 + $0x10] sm:$0xff]
  %v100 = vld [vmem:[%s3 + $0x18] sm:$0xff]
  %v101 = vld [vmem:[%s3 + $0x20] sm:$0xff]
  %v102 = vld [vmem:[%s3 + $0x28] sm:$0xff]
  %v103 = vld [vmem:[%s3 + $0x30] sm:$0xff]
  %v104 = vld [vmem:[%s3 + $0x38] sm:$0xff]
  %v105 = vld [vmem:[%s3 + $0x40] sm:$0xff]
  %v106 = vld [vmem:[%s3 + $0x48] sm:$0xff]
  %v107 = vld [vmem:[%s3 + $0x50] sm:$0xff]
  %v108 = vld [vmem:[%s3 + $0x58] sm:$0xff]
  %v109 = vld [vmem:[%s3 + $0x60] sm:$0xff]
  %v110 = vld [vmem:[%s3 + $0x68] sm:$0xff]
  %v111 = vld [vmem:[%s3 + $0x70] sm:$0xff]
  %v112 = vld [vmem:[%s3 + $0x78] sm:$0xff]
  %v113 = vld [vmem:[%s3 + $0x80] sm:$0xff]
  %v114 = vld [vmem:[%s3 + $0x88] sm:$0xff]
  %v115 = vld [vmem:[%s3 + $0x90] sm:$0xff]
  %v116 = vld [vmem:[%s3 + $0x98] sm:$0xff]
  %v117 = vld [vmem:[%s3 + $0xa0] sm:$0xff]
  %v118 = vld [vmem:[%s3 + $0xa8] sm:$0xff]
  %v119 = vld [vmem:[%s3 + $0xb0] sm:$0xff]
  %v120 = vld [vmem:[%s3 + $0xb8] sm:$0xff]
  %v121 = vld [vmem:[%s3 + $0xc0] sm:$0xff]
  %v122 = vld [vmem:[%s3 + $0xc8] sm:$0xff]
  %v123 = vld [vmem:[%s3 + $0xd0] sm:$0xff]
  %v124 = vld [vmem:[%s3 + $0xd8] sm:$0xff]
  %v125 = vld [vmem:[%s3 + $0xe0] sm:$0xff]
  %v126 = vld [vmem:[%s3 + $0xe8] sm:$0xff]
  %v127 = vld [vmem:[%s3 + $0xf0] sm:$0xff]
  %v128 = vld [vmem:[%s3 + $0xf8] sm:$0xff]
  %v129 = vld [vmem:[%s3 + $0x100] sm:$0xff]
  %v130 = vld [vmem:[%s3 + $0x108] sm:$0xff]
  %v131 = vld [vmem:[%s3 + $0x110] sm:$0xff]
  %v132 = vld [vmem:[%s3 + $0x118] sm:$0xff]
  %v133 = vld [vmem:[%s3 + $0x120] sm:$0xff]
  %v134 = vld [vmem:[%s3 + $0x128] sm:$0xff]
  %v135 = vld [vmem:[%s3 + $0x130] sm:$0xff]
  %v136 = vld [vmem:[%s3 + $0x138] sm:$0xff]
  %v137 = vld [vmem:[%s3 + $0x140] sm:$0xff]
  %v138 = vld [vmem:[%s3 + $0x148] sm:$0xff]
  %v139 = vld [vmem:[%s3 + $0x150] sm:$0xff]
  %v140 = vld [vmem:[%s3 + $0x158] sm:$0xff]
  %v141 = vld [vmem:[%s3 + $0x160] sm:$0xff]
  %v142 = vld [vmem:[%s3 + $0x168] sm:$0xff]
  %v143 = vld [vmem:[%s3 + $0x170] sm:$0xff]
  %v144 = vld [vmem:[%s3 + $0x178] sm:$0xff]
  %v145 = vld [vmem:[%s3 + $0x180] sm:$0xff]
  %v146 = vld [vmem:[%s3 + $0x188] sm:$0xff]
  %v147 = vld [vmem:[%s3 + $0x190] sm:$0xff]
  %v148 = vld [vmem:[%s3 + $0x198] sm:$0xff]
  %v149 = vld [vmem:[%s3 + $0x1a0] sm:$0xff]
  %v150 = vld [vmem:[%s3 + $0x1a8] sm:$0xff]
  %v153 = vunpack.c.l.b16 %v95
  %v154 = vunpack.c.h.b16 %v95
  %v155 = vunpack.c.l.b16 %v96
  %v156 = vunpack.c.h.b16 %v96
  %v157 = vpack.c.b16 %v155, %v153
  %v158 = vpack.c.b16 %v156, %v154
  %v214 = vunpack.c.l.b16 %v97
  %v215 = vunpack.c.h.b16 %v97
  %v216 = vunpack.c.l.b16 %v98
  %v217 = vunpack.c.h.b16 %v98
  %v218 = vunpack.c.l.b16 %v99
  %v219 = vunpack.c.h.b16 %v99
  %v220 = vunpack.c.l.b16 %v100
  %v221 = vunpack.c.h.b16 %v100
  %v222 = vunpack.c.l.b16 %v101
  %v223 = vunpack.c.h.b16 %v101
  %v224 = vunpack.c.l.b16 %v102
  %v225 = vunpack.c.h.b16 %v102
  %v226 = vunpack.c.l.b16 %v103
  %v227 = vunpack.c.h.b16 %v103
  %v228 = vunpack.c.l.b16 %v104
  %v229 = vunpack.c.h.b16 %v104
  %v230 = vunpack.c.l.b16 %v105
  %v231 = vunpack.c.h.b16 %v105
  %v232 = vunpack.c.l.b16 %v106
  %v233 = vunpack.c.h.b16 %v106
  %v234 = vunpack.c.l.b16 %v107
  %v235 = vunpack.c.h.b16 %v107
  %v236 = vunpack.c.l.b16 %v108
  %v237 = vunpack.c.h.b16 %v108
  %v238 = vunpack.c.l.b16 %v109
  %v239 = vunpack.c.h.b16 %v109
  %v240 = vunpack.c.l.b16 %v110
  %v241 = vunpack.c.h.b16 %v110
  %v242 = vunpack.c.l.b16 %v111
  %v243 = vunpack.c.h.b16 %v111
  %v244 = vunpack.c.l.b16 %v112
  %v245 = vunpack.c.h.b16 %v112
  %v246 = vunpack.c.l.b16 %v113
  %v247 = vunpack.c.h.b16 %v113
  %v248 = vunpack.c.l.b16 %v114
  %v249 = vunpack.c.h.b16 %v114
  %v250 = vunpack.c.l.b16 %v115
  %v251 = vunpack.c.h.b16 %v115
  %v252 = vunpack.c.l.b16 %v116
  %v253 = vunpack.c.h.b16 %v116
  %v254 = vunpack.c.l.b16 %v117
  %v255 = vunpack.c.h.b16 %v117
  %v256 = vunpack.c.l.b16 %v118
  %v257 = vunpack.c.h.b16 %v118
  %v258 = vunpack.c.l.b16 %v119
  %v259 = vunpack.c.h.b16 %v119
  %v260 = vunpack.c.l.b16 %v120
  %v261 = vunpack.c.h.b16 %v120
  %v262 = vunpack.c.l.b16 %v121
  %v263 = vunpack.c.h.b16 %v121
  %v264 = vunpack.c.l.b16 %v122
  %v265 = vunpack.c.h.b16 %v122
  %v266 = vunpack.c.l.b16 %v123
  %v267 = vunpack.c.h.b16 %v123
  %v268 = vunpack.c.l.b16 %v124
  %v269 = vunpack.c.h.b16 %v124
  %v270 = vunpack.c.l.b16 %v125
  %v271 = vunpack.c.h.b16 %v125
  %v272 = vunpack.c.l.b16 %v126
  %v273 = vunpack.c.h.b16 %v126
  %v274 = vunpack.c.l.b16 %v127
  %v275 = vunpack.c.h.b16 %v127
  %v276 = vunpack.c.l.b16 %v128
  %v277 = vunpack.c.h.b16 %v128
  %v278 = vunpack.c.l.b16 %v129
  %v279 = vunpack.c.h.b16 %v129
  %v280 = vunpack.c.l.b16 %v130
  %v281 = vunpack.c.h.b16 %v130
  %v282 = vunpack.c.l.b16 %v131
  %v283 = vunpack.c.h.b16 %v131
  %v284 = vunpack.c.l.b16 %v132
  %v285 = vunpack.c.h.b16 %v132
  %v286 = vunpack.c.l.b16 %v133
  %v287 = vunpack.c.h.b16 %v133
  %v288 = vunpack.c.l.b16 %v134
  %v289 = vunpack.c.h.b16 %v134
  %v290 = vunpack.c.l.b16 %v135
  %v291 = vunpack.c.h.b16 %v135
  %v292 = vunpack.c.l.b16 %v136
  %v293 = vunpack.c.h.b16 %v136
  %v294 = vunpack.c.l.b16 %v137
  %v295 = vunpack.c.h.b16 %v137
  %v296 = vunpack.c.l.b16 %v138
  %v297 = vunpack.c.h.b16 %v138
  %v298 = vunpack.c.l.b16 %v139
  %v299 = vunpack.c.h.b16 %v139
  %v300 = vunpack.c.l.b16 %v140
  %v301 = vunpack.c.h.b16 %v140
  %v302 = vunpack.c.l.b16 %v141
  %v303 = vunpack.c.h.b16 %v141
  %v304 = vunpack.c.l.b16 %v142
  %v305 = vunpack.c.h.b16 %v142
  %v306 = vunpack.c.l.b16 %v143
  %v307 = vunpack.c.h.b16 %v143
  %v308 = vunpack.c.l.b16 %v144
  %v309 = vunpack.c.h.b16 %v144
  %v310 = vunpack.c.l.b16 %v145
  %v311 = vunpack.c.h.b16 %v145
  %v312 = vunpack.c.l.b16 %v146
  %v313 = vunpack.c.h.b16 %v146
  %v314 = vunpack.c.l.b16 %v147
  %v315 = vunpack.c.h.b16 %v147
  %v316 = vunpack.c.l.b16 %v148
  %v317 = vunpack.c.h.b16 %v148
  %v318 = vunpack.c.l.b16 %v149
  %v319 = vunpack.c.h.b16 %v149
  %v320 = vunpack.c.l.b16 %v150
  %v321 = vunpack.c.h.b16 %v150
  %v322 = vpack.c.b16 %v218, %v214
  %v323 = vpack.c.b16 %v219, %v215
  %v324 = vpack.c.b16 %v220, %v216
  %v325 = vpack.c.b16 %v221, %v217
  %v326 = vpack.c.b16 %v226, %v222
  %v327 = vpack.c.b16 %v227, %v223
  %v328 = vpack.c.b16 %v228, %v224
  %v329 = vpack.c.b16 %v229, %v225
  %v330 = vpack.c.b16 %v234, %v230
  %v331 = vpack.c.b16 %v235, %v231
  %v332 = vpack.c.b16 %v236, %v232
  %v333 = vpack.c.b16 %v237, %v233
  %v334 = vpack.c.b16 %v242, %v238
  %v335 = vpack.c.b16 %v243, %v239
  %v336 = vpack.c.b16 %v244, %v240
  %v337 = vpack.c.b16 %v245, %v241
  %v338 = vpack.c.b16 %v250, %v246
  %v339 = vpack.c.b16 %v251, %v247
  %v340 = vpack.c.b16 %v252, %v248
  %v341 = vpack.c.b16 %v253, %v249
  %v342 = vpack.c.b16 %v258, %v254
  %v343 = vpack.c.b16 %v259, %v255
  %v344 = vpack.c.b16 %v260, %v256
  %v345 = vpack.c.b16 %v261, %v257
  %v346 = vpack.c.b16 %v266, %v262
  %v347 = vpack.c.b16 %v267, %v263
  %v348 = vpack.c.b16 %v268, %v264
  %v349 = vpack.c.b16 %v269, %v265
  %v350 = vpack.c.b16 %v274, %v270
  %v351 = vpack.c.b16 %v275, %v271
  %v352 = vpack.c.b16 %v276, %v272
  %v353 = vpack.c.b16 %v277, %v273
  %v354 = vpack.c.b16 %v282, %v278
  %v355 = vpack.c.b16 %v283, %v279
  %v356 = vpack.c.b16 %v284, %v280
  %v357 = vpack.c.b16 %v285, %v281
  %v358 = vpack.c.b16 %v290, %v286
  %v359 = vpack.c.b16 %v291, %v287
  %v360 = vpack.c.b16 %v292, %v288
  %v361 = vpack.c.b16 %v293, %v289
  %v362 = vpack.c.b16 %v298, %v294
  %v363 = vpack.c.b16 %v299, %v295
  %v364 = vpack.c.b16 %v300, %v296
  %v365 = vpack.c.b16 %v301, %v297
  %v366 = vpack.c.b16 %v306, %v302
  %v367 = vpack.c.b16 %v307, %v303
  %v368 = vpack.c.b16 %v308, %v304
  %v369 = vpack.c.b16 %v309, %v305
  %v370 = vpack.c.b16 %v314, %v310
  %v371 = vpack.c.b16 %v315, %v311
  %v372 = vpack.c.b16 %v316, %v312
  %v373 = vpack.c.b16 %v317, %v313
  %v374 = vpack.c.b16 %v318, %v318
  %v375 = vpack.c.b16 %v319, %v319
  %v376 = vpack.c.b16 %v320, %v320
  %v377 = vpack.c.b16 %v321, %v321
  %vm430 = vcmask 719872
  %v432 = vsel %vm430, %v158, 0
  %vm434 = vcmask 1043456
  %v436 = vsel %vm434, %v374, 0
  %v439 = vsel %vm434, %v375, 0
  %v442 = vsel %vm434, %v376, 0
  %v445 = vsel %vm434, %v377, 0
  %447 = vmatprep.subr.bf16.mxu0 %v351
  %448 = vmatpush1.bf16.msra.mxu0 %v350
  %449 = vmatprep.subr.bf16.mxu0 %v347
  %450 = vmatpush1.bf16.msra.mxu0 %v346
  %451 = vmatprep.subr.bf16.mxu0 %v343
  %452 = vmatpush1.bf16.msra.mxu0 %v342
  %453 = vmatprep.subr.bf16.mxu0 %v339
  %454 = vmatpush1.bf16.msra.mxu0 %v338
  %455 = vmatprep.subr.bf16.mxu0 %v335
  %456 = vmatpush1.bf16.msra.mxu0 %v334
  %457 = vmatprep.subr.bf16.mxu0 %v331
  %458 = vmatpush1.bf16.msra.mxu0 %v330
  %459 = vmatprep.subr.bf16.mxu0 %v327
  %460 = vmatpush1.bf16.msra.mxu0 %v326
  %461 = vmatprep.subr.bf16.mxu0 %v323
  %462 = vmatpush1.bf16.msra.mxu0 %v322
  %463 = vmatprep.subr.bf16.mxu0 0
  %464 = vmatpush2.bf16.msra.mxu0 0
  %465 = vmatprep.subr.bf16.mxu0 0
  %466 = vmatpush2.bf16.msra.mxu0 0
  %467 = vmatprep.subr.bf16.mxu0 %v439
  %468 = vmatpush2.bf16.msra.mxu0 %v436
  %469 = vmatprep.subr.bf16.mxu0 %v371
  %470 = vmatpush2.bf16.msra.mxu0 %v370
  %471 = vmatprep.subr.bf16.mxu0 %v367
  %472 = vmatpush2.bf16.msra.mxu0 %v366
  %473 = vmatprep.subr.bf16.mxu0 %v363
  %474 = vmatpush2.bf16.msra.mxu0 %v362
  %475 = vmatprep.subr.bf16.mxu0 %v359
  %476 = vmatpush2.bf16.msra.mxu0 %v358
  %477 = vmatprep.subr.bf16.mxu0 %v355
  %478 = vmatpush2.bf16.msra.mxu0 %v354
  %479 = vmatprep.mubr.bf16.mxu0 %v432
  %480 = vmatmul.mubr.bf16.gmra.mxu0 %v157
  %v481 = vpop.f32.mrf.mxu0
  %v482 = vadd.f32 0.0, %v481
  %v483 = vpop.f32.mrf.mxu0
  %v484 = vadd.f32 0.0, %v483
  %v485 = vpop.f32.mrf.mxu0
  %v486 = vadd.f32 0.0, %v485
  %v487 = vpop.f32.mrf.mxu0
  %v488 = vadd.f32 0.0, %v487
  %489 = vdwg.mxu0
  %490 = vmatprep.subr.bf16.mxu0 %v353
  %491 = vmatpush1.bf16.msra.mxu0 %v352
  %492 = vmatprep.subr.bf16.mxu0 %v349
  %493 = vmatpush1.bf16.msra.mxu0 %v348
  %494 = vmatprep.subr.bf16.mxu0 %v345
  %495 = vmatpush1.bf16.msra.mxu0 %v344
  %496 = vmatprep.subr.bf16.mxu0 %v341
  %497 = vmatpush1.bf16.msra.mxu0 %v340
  %498 = vmatprep.subr.bf16.mxu0 %v337
  %499 = vmatpush1.bf16.msra.mxu0 %v336
  %500 = vmatprep.subr.bf16.mxu0 %v333
  %501 = vmatpush1.bf16.msra.mxu0 %v332
  %502 = vmatprep.subr.bf16.mxu0 %v329
  %503 = vmatpush1.bf16.msra.mxu0 %v328
  %504 = vmatprep.subr.bf16.mxu0 %v325
  %505 = vmatpush1.bf16.msra.mxu0 %v324
  %506 = vmatprep.subr.bf16.mxu0 0
  %507 = vmatpush2.bf16.msra.mxu0 0
  %508 = vmatprep.subr.bf16.mxu0 0
  %509 = vmatpush2.bf16.msra.mxu0 0
  %510 = vmatprep.subr.bf16.mxu0 %v445
  %511 = vmatpush2.bf16.msra.mxu0 %v442
  %512 = vmatprep.subr.bf16.mxu0 %v373
  %513 = vmatpush2.bf16.msra.mxu0 %v372
  %514 = vmatprep.subr.bf16.mxu0 %v369
  %515 = vmatpush2.bf16.msra.mxu0 %v368
  %516 = vmatprep.subr.bf16.mxu0 %v365
  %517 = vmatpush2.bf16.msra.mxu0 %v364
  %518 = vmatprep.subr.bf16.mxu0 %v361
  %519 = vmatpush2.bf16.msra.mxu0 %v360
  %520 = vmatprep.subr.bf16.mxu0 %v357
  %521 = vmatpush2.bf16.msra.mxu0 %v356
  %522 = vmatprep.mubr.bf16.mxu0 %v432
  %523 = vmatmul.mubr.bf16.gmra.mxu0 %v157
  %v524 = vpop.f32.mrf.mxu0
  %v525 = vadd.f32 0.0, %v524
  %v526 = vpop.f32.mrf.mxu0
  %v527 = vadd.f32 0.0, %v526
  %v528 = vpop.f32.mrf.mxu0
  %v529 = vadd.f32 0.0, %v528
  %v530 = vpop.f32.mrf.mxu0
  %v531 = vadd.f32 0.0, %v530
  %532 = vdwg.mxu0
  %v533 = vld [vmem:[%s1] sm:$0xff]
  %v534 = vld [vmem:[%s1 + $0x8] sm:$0xff]
  %v537 = vcombine.low %v533, %v534
  %v538 = vcombine.high %v533, %v534
  %v540 = vunpack.c.l.s4 1966171168
  %v541 = vunpack.c.0.s8 %v540
  %v542 = vlaneseq
  %v543 = vshrl.u32 %v542, 7
  %v544 = vsub.s32 %v541, %v543
  %v545 = vrot.slane %v537, %v544
  %v547 = vunpack.c.l.s4 1966171168
  %v548 = vunpack.c.0.s8 %v547
  %v549 = vlaneseq
  %v550 = vshrl.u32 %v549, 7
  %v551 = vsub.s32 %v548, %v550
  %v552 = vrot.slane %v538, %v551
  %v553 = vcombine.high %v545, %v545
  %v554 = vcombine.high %v552, %v552
  %v556 = vunpack.c.l.s4 1966171168
  %v557 = vunpack.c.0.s8 %v556
  %v558 = vlaneseq
  %v559 = vshrl.u32 %v558, 7
  %v560 = vsub.s32 %v557, %v559
  %v561 = vrot.slane %v545, %v560
  %v563 = vunpack.c.l.s4 1966171168
  %v564 = vunpack.c.0.s8 %v563
  %v565 = vlaneseq
  %v566 = vshrl.u32 %v565, 7
  %v567 = vsub.s32 %v564, %v566
  %v568 = vrot.slane %v552, %v567
  %v570 = vunpack.c.l.s4 1966171168
  %v571 = vunpack.c.0.s8 %v570
  %v572 = vlaneseq
  %v573 = vshrl.u32 %v572, 7
  %v574 = vsub.s32 %v571, %v573
  %v575 = vrot.slane %v553, %v574
  %v577 = vunpack.c.l.s4 1966171168
  %v578 = vunpack.c.0.s8 %v577
  %v579 = vlaneseq
  %v580 = vshrl.u32 %v579, 7
  %v581 = vsub.s32 %v578, %v580
  %v582 = vrot.slane %v554, %v581
  %v583 = vcombine.high %v561, %v561
  %v584 = vcombine.high %v568, %v568
  %v585 = vcombine.high %v575, %v575
  %v586 = vcombine.high %v582, %v582
  %v587 = vlaneseq
  %v588 = vshrl.u32 %v587, 7
  %v589 = vsub.s32 0, %v588
  %v590 = vrot.slane %v561, %v589
  %v591 = vlaneseq
  %v592 = vshrl.u32 %v591, 7
  %v593 = vsub.s32 1, %v592
  %v594 = vrot.slane %v561, %v593
  %v595 = vlaneseq
  %v596 = vshrl.u32 %v595, 7
  %v597 = vsub.s32 0, %v596
  %v598 = vrot.slane %v575, %v597
  %v599 = vlaneseq
  %v600 = vshrl.u32 %v599, 7
  %v601 = vsub.s32 1, %v600
  %v602 = vrot.slane %v575, %v601
  %v603 = vlaneseq
  %v604 = vshrl.u32 %v603, 7
  %v605 = vsub.s32 0, %v604
  %v606 = vrot.slane %v583, %v605
  %v607 = vlaneseq
  %v608 = vshrl.u32 %v607, 7
  %v609 = vsub.s32 1, %v608
  %v610 = vrot.slane %v583, %v609
  %v611 = vlaneseq
  %v612 = vshrl.u32 %v611, 7
  %v613 = vsub.s32 0, %v612
  %v614 = vrot.slane %v585, %v613
  %v615 = vlaneseq
  %v616 = vshrl.u32 %v615, 7
  %v617 = vsub.s32 1, %v616
  %v618 = vrot.slane %v585, %v617
  %v619 = vlaneseq
  %v620 = vshrl.u32 %v619, 7
  %v621 = vsub.s32 0, %v620
  %v622 = vrot.slane %v568, %v621
  %v623 = vlaneseq
  %v624 = vshrl.u32 %v623, 7
  %v625 = vsub.s32 1, %v624
  %v626 = vrot.slane %v568, %v625
  %v627 = vlaneseq
  %v628 = vshrl.u32 %v627, 7
  %v629 = vsub.s32 0, %v628
  %v630 = vrot.slane %v582, %v629
  %v631 = vlaneseq
  %v632 = vshrl.u32 %v631, 7
  %v633 = vsub.s32 1, %v632
  %v634 = vrot.slane %v582, %v633
  %v635 = vlaneseq
  %v636 = vshrl.u32 %v635, 7
  %v637 = vsub.s32 0, %v636
  %v638 = vrot.slane %v584, %v637
  %v639 = vlaneseq
  %v640 = vshrl.u32 %v639, 7
  %v641 = vsub.s32 1, %v640
  %v642 = vrot.slane %v584, %v641
  %v643 = vlaneseq
  %v644 = vshrl.u32 %v643, 7
  %v645 = vsub.s32 0, %v644
  %v646 = vrot.slane %v586, %v645
  %v647 = vlaneseq
  %v648 = vshrl.u32 %v647, 7
  %v649 = vsub.s32 1, %v648
  %v650 = vrot.slane %v586, %v649
  %v651 = vcombine.low %v590, %v594
  %v653 = vunpack.c.l.s4 1983009808
  %v654 = vunpack.c.0.s8 %v653
  %v655 = vlaneseq
  %v656 = vshrl.u32 %v655, 7
  %v657 = vsub.s32 %v654, %v656
  %v658 = vrot.slane %v651, %v657
  %v659 = vcombine.low %v598, %v602
  %v661 = vunpack.c.l.s4 1983009808
  %v662 = vunpack.c.0.s8 %v661
  %v663 = vlaneseq
  %v664 = vshrl.u32 %v663, 7
  %v665 = vsub.s32 %v662, %v664
  %v666 = vrot.slane %v659, %v665
  %v667 = vcombine.low %v606, %v610
  %v669 = vunpack.c.l.s4 1983009808
  %v670 = vunpack.c.0.s8 %v669
  %v671 = vlaneseq
  %v672 = vshrl.u32 %v671, 7
  %v673 = vsub.s32 %v670, %v672
  %v674 = vrot.slane %v667, %v673
  %v675 = vcombine.low %v614, %v618
  %v677 = vunpack.c.l.s4 1983009808
  %v678 = vunpack.c.0.s8 %v677
  %v679 = vlaneseq
  %v680 = vshrl.u32 %v679, 7
  %v681 = vsub.s32 %v678, %v680
  %v682 = vrot.slane %v675, %v681
  %v683 = vcombine.low %v622, %v626
  %v685 = vunpack.c.l.s4 1983009808
  %v686 = vunpack.c.0.s8 %v685
  %v687 = vlaneseq
  %v688 = vshrl.u32 %v687, 7
  %v689 = vsub.s32 %v686, %v688
  %v690 = vrot.slane %v683, %v689
  %v691 = vcombine.low %v630, %v634
  %v693 = vunpack.c.l.s4 1983009808
  %v694 = vunpack.c.0.s8 %v693
  %v695 = vlaneseq
  %v696 = vshrl.u32 %v695, 7
  %v697 = vsub.s32 %v694, %v696
  %v698 = vrot.slane %v691, %v697
  %v699 = vcombine.low %v638, %v642
  %v701 = vunpack.c.l.s4 1983009808
  %v702 = vunpack.c.0.s8 %v701
  %v703 = vlaneseq
  %v704 = vshrl.u32 %v703, 7
  %v705 = vsub.s32 %v702, %v704
  %v706 = vrot.slane %v699, %v705
  %v707 = vcombine.low %v646, %v650
  %v709 = vunpack.c.l.s4 1983009808
  %v710 = vunpack.c.0.s8 %v709
  %v711 = vlaneseq
  %v712 = vshrl.u32 %v711, 7
  %v713 = vsub.s32 %v710, %v712
  %v714 = vrot.slane %v707, %v713
  %v715 = vcombine.low %v658, %v666
  %v716 = vcombine.low %v674, %v682
  %v718 = vunpack.c.l.s4 1983009808
  %v719 = vunpack.c.0.s8 %v718
  %v720 = vlaneseq
  %v721 = vshrl.u32 %v720, 7
  %v722 = vsub.s32 %v719, %v721
  %v723 = vrot.slane %v715, %v722
  %v725 = vunpack.c.l.s4 1983009808
  %v726 = vunpack.c.0.s8 %v725
  %v727 = vlaneseq
  %v728 = vshrl.u32 %v727, 7
  %v729 = vsub.s32 %v726, %v728
  %v730 = vrot.slane %v716, %v729
  %v731 = vcombine.low %v723, %v730
  %v732 = vcombine.high %v723, %v730
  %v733 = vcombine.low %v690, %v698
  %v734 = vcombine.low %v706, %v714
  %v736 = vunpack.c.l.s4 1983009808
  %v737 = vunpack.c.0.s8 %v736
  %v738 = vlaneseq
  %v739 = vshrl.u32 %v738, 7
  %v740 = vsub.s32 %v737, %v739
  %v741 = vrot.slane %v733, %v740
  %v743 = vunpack.c.l.s4 1983009808
  %v744 = vunpack.c.0.s8 %v743
  %v745 = vlaneseq
  %v746 = vshrl.u32 %v745, 7
  %v747 = vsub.s32 %v744, %v746
  %v748 = vrot.slane %v734, %v747
  %v749 = vcombine.low %v741, %v748
  %v750 = vcombine.high %v741, %v748
  %v755 = vadd.f32 %v482, %v731
  %v756 = vadd.f32 %v484, %v732
  %v757 = vadd.f32 %v486, %v749
  %v758 = vadd.f32 %v488, %v750
  %v759 = vadd.f32 %v755, %v50
  %v760 = vadd.f32 %v756, %v54
  %v761 = vadd.f32 %v757, %v50
  %v762 = vadd.f32 %v758, %v54
  %v763 = vmax.f32 %v759, 0.0
  %v764 = vmax.f32 %v760, 0.0
  %v765 = vmax.f32 %v761, 0.0
  %v766 = vmax.f32 %v762, 0.0
  %v767 = vpack.c.bf16 %v765, %v763
  %v768 = vpack.c.bf16 %v766, %v764
  %v769 = vld [vmem:[%s5] sm:$0xff]
  %v770 = vld [vmem:[%s5 + $0x8] sm:$0xff]
  %v771 = vld [vmem:[%s5 + $0x10] sm:$0xff]
  %v772 = vld [vmem:[%s5 + $0x18] sm:$0xff]
  %v773 = vld [vmem:[%s5 + $0x20] sm:$0xff]
  %v774 = vld [vmem:[%s5 + $0x28] sm:$0xff]
  %v775 = vld [vmem:[%s5 + $0x30] sm:$0xff]
  %v776 = vld [vmem:[%s5 + $0x38] sm:$0xff]
  %v777 = vld [vmem:[%s5 + $0x40] sm:$0xff]
  %v778 = vld [vmem:[%s5 + $0x48] sm:$0xff]
  %v779 = vld [vmem:[%s5 + $0x50] sm:$0xff]
  %v780 = vld [vmem:[%s5 + $0x58] sm:$0xff]
  %v781 = vld [vmem:[%s5 + $0x60] sm:$0xff]
  %v782 = vld [vmem:[%s5 + $0x68] sm:$0xff]
  %v783 = vld [vmem:[%s5 + $0x70] sm:$0xff]
  %v784 = vld [vmem:[%s5 + $0x78] sm:$0xff]
  %v785 = vld [vmem:[%s5 + $0x80] sm:$0xff]
  %v786 = vld [vmem:[%s5 + $0x88] sm:$0xff]
  %v787 = vld [vmem:[%s5 + $0x90] sm:$0xff]
  %v788 = vld [vmem:[%s5 + $0x98] sm:$0xff]
  %v789 = vld [vmem:[%s5 + $0xa0] sm:$0xff]
  %v790 = vld [vmem:[%s5 + $0xa8] sm:$0xff]
  %v791 = vld [vmem:[%s5 + $0xb0] sm:$0xff]
  %v792 = vld [vmem:[%s5 + $0xb8] sm:$0xff]
  %v793 = vld [vmem:[%s5 + $0xc0] sm:$0xff]
  %v794 = vld [vmem:[%s5 + $0xc8] sm:$0xff]
  %v795 = vld [vmem:[%s5 + $0xd0] sm:$0xff]
  %v796 = vld [vmem:[%s5 + $0xd8] sm:$0xff]
  %v797 = vld [vmem:[%s5 + $0xe0] sm:$0xff]
  %v798 = vld [vmem:[%s5 + $0xe8] sm:$0xff]
  %v799 = vld [vmem:[%s5 + $0xf0] sm:$0xff]
  %v800 = vld [vmem:[%s5 + $0xf8] sm:$0xff]
  %v833 = vunpack.c.l.b16 %v769
  %v834 = vunpack.c.h.b16 %v769
  %v835 = vunpack.c.l.b16 %v770
  %v836 = vunpack.c.h.b16 %v770
  %v837 = vunpack.c.l.b16 %v771
  %v838 = vunpack.c.h.b16 %v771
  %v839 = vunpack.c.l.b16 %v772
  %v840 = vunpack.c.h.b16 %v772
  %v841 = vunpack.c.l.b16 %v773
  %v842 = vunpack.c.h.b16 %v773
  %v843 = vunpack.c.l.b16 %v774
  %v844 = vunpack.c.h.b16 %v774
  %v845 = vunpack.c.l.b16 %v775
  %v846 = vunpack.c.h.b16 %v775
  %v847 = vunpack.c.l.b16 %v776
  %v848 = vunpack.c.h.b16 %v776
  %v849 = vunpack.c.l.b16 %v777
  %v850 = vunpack.c.h.b16 %v777
  %v851 = vunpack.c.l.b16 %v778
  %v852 = vunpack.c.h.b16 %v778
  %v853 = vunpack.c.l.b16 %v779
  %v854 = vunpack.c.h.b16 %v779
  %v855 = vunpack.c.l.b16 %v780
  %v856 = vunpack.c.h.b16 %v780
  %v857 = vunpack.c.l.b16 %v781
  %v858 = vunpack.c.h.b16 %v781
  %v859 = vunpack.c.l.b16 %v782
  %v860 = vunpack.c.h.b16 %v782
  %v861 = vunpack.c.l.b16 %v783
  %v862 = vunpack.c.h.b16 %v783
  %v863 = vunpack.c.l.b16 %v784
  %v864 = vunpack.c.h.b16 %v784
  %v865 = vunpack.c.l.b16 %v785
  %v866 = vunpack.c.h.b16 %v785
  %v867 = vunpack.c.l.b16 %v786
  %v868 = vunpack.c.h.b16 %v786
  %v869 = vunpack.c.l.b16 %v787
  %v870 = vunpack.c.h.b16 %v787
  %v871 = vunpack.c.l.b16 %v788
  %v872 = vunpack.c.h.b16 %v788
  %v873 = vunpack.c.l.b16 %v789
  %v874 = vunpack.c.h.b16 %v789
  %v875 = vunpack.c.l.b16 %v790
  %v876 = vunpack.c.h.b16 %v790
  %v877 = vunpack.c.l.b16 %v791
  %v878 = vunpack.c.h.b16 %v791
  %v879 = vunpack.c.l.b16 %v792
  %v880 = vunpack.c.h.b16 %v792
  %v881 = vunpack.c.l.b16 %v793
  %v882 = vunpack.c.h.b16 %v793
  %v883 = vunpack.c.l.b16 %v794
  %v884 = vunpack.c.h.b16 %v794
  %v885 = vunpack.c.l.b16 %v795
  %v886 = vunpack.c.h.b16 %v795
  %v887 = vunpack.c.l.b16 %v796
  %v888 = vunpack.c.h.b16 %v796
  %v889 = vunpack.c.l.b16 %v797
  %v890 = vunpack.c.h.b16 %v797
  %v891 = vunpack.c.l.b16 %v798
  %v892 = vunpack.c.h.b16 %v798
  %v893 = vunpack.c.l.b16 %v799
  %v894 = vunpack.c.h.b16 %v799
  %v895 = vunpack.c.l.b16 %v800
  %v896 = vunpack.c.h.b16 %v800
  %v897 = vpack.c.b16 %v835, %v833
  %v898 = vpack.c.b16 %v836, %v834
  %v899 = vpack.c.b16 %v839, %v837
  %v900 = vpack.c.b16 %v840, %v838
  %v901 = vpack.c.b16 %v843, %v841
  %v902 = vpack.c.b16 %v844, %v842
  %v903 = vpack.c.b16 %v847, %v845
  %v904 = vpack.c.b16 %v848, %v846
  %v905 = vpack.c.b16 %v851, %v849
  %v906 = vpack.c.b16 %v852, %v850
  %v907 = vpack.c.b16 %v855, %v853
  %v908 = vpack.c.b16 %v856, %v854
  %v909 = vpack.c.b16 %v859, %v857
  %v910 = vpack.c.b16 %v860, %v858
  %v911 = vpack.c.b16 %v863, %v861
  %v912 = vpack.c.b16 %v864, %v862
  %v913 = vpack.c.b16 %v867, %v865
  %v914 = vpack.c.b16 %v868, %v866
  %v915 = vpack.c.b16 %v871, %v869
  %v916 = vpack.c.b16 %v872, %v870
  %v917 = vpack.c.b16 %v875, %v873
  %v918 = vpack.c.b16 %v876, %v874
  %v919 = vpack.c.b16 %v879, %v877
  %v920 = vpack.c.b16 %v880, %v878
  %v921 = vpack.c.b16 %v883, %v881
  %v922 = vpack.c.b16 %v884, %v882
  %v923 = vpack.c.b16 %v887, %v885
  %v924 = vpack.c.b16 %v888, %v886
  %v925 = vpack.c.b16 %v891, %v889
  %v926 = vpack.c.b16 %v892, %v890
  %v927 = vpack.c.b16 %v895, %v893
  %v928 = vpack.c.b16 %v896, %v894
  %961 = vmatprep.subr.bf16.mxu0 %v912
  %962 = vmatpush1.bf16.msra.mxu0 %v911
  %963 = vmatprep.subr.bf16.mxu0 %v910
  %964 = vmatpush1.bf16.msra.mxu0 %v909
  %965 = vmatprep.subr.bf16.mxu0 %v908
  %966 = vmatpush1.bf16.msra.mxu0 %v907
  %967 = vmatprep.subr.bf16.mxu0 %v906
  %968 = vmatpush1.bf16.msra.mxu0 %v905
  %969 = vmatprep.subr.bf16.mxu0 %v904
  %970 = vmatpush1.bf16.msra.mxu0 %v903
  %971 = vmatprep.subr.bf16.mxu0 %v902
  %972 = vmatpush1.bf16.msra.mxu0 %v901
  %973 = vmatprep.subr.bf16.mxu0 %v900
  %974 = vmatpush1.bf16.msra.mxu0 %v899
  %975 = vmatprep.subr.bf16.mxu0 %v898
  %976 = vmatpush1.bf16.msra.mxu0 %v897
  %977 = vmatprep.subr.bf16.mxu0 %v928
  %978 = vmatpush2.bf16.msra.mxu0 %v927
  %979 = vmatprep.subr.bf16.mxu0 %v926
  %980 = vmatpush2.bf16.msra.mxu0 %v925
  %981 = vmatprep.subr.bf16.mxu0 %v924
  %982 = vmatpush2.bf16.msra.mxu0 %v923
  %983 = vmatprep.subr.bf16.mxu0 %v922
  %984 = vmatpush2.bf16.msra.mxu0 %v921
  %985 = vmatprep.subr.bf16.mxu0 %v920
  %986 = vmatpush2.bf16.msra.mxu0 %v919
  %987 = vmatprep.subr.bf16.mxu0 %v918
  %988 = vmatpush2.bf16.msra.mxu0 %v917
  %989 = vmatprep.subr.bf16.mxu0 %v916
  %990 = vmatpush2.bf16.msra.mxu0 %v915
  %991 = vmatprep.subr.bf16.mxu0 %v914
  %992 = vmatpush2.bf16.msra.mxu0 %v913
  %993 = vmatprep.mubr.bf16.mxu0 %v768
  %994 = vmatmul.mubr.bf16.gmra.mxu0 %v767
  %v995 = vpop.f32.mrf.mxu0
  %v996 = vadd.f32 %v62, %v995
  %v997 = vpop.f32.mrf.mxu0
  %v998 = vadd.f32 %v66, %v997
  %v999 = vpop.f32.mrf.mxu0
  %v1000 = vadd.f32 %v62, %v999
  %v1001 = vpop.f32.mrf.mxu0
  %v1002 = vadd.f32 %v66, %v1001
  %1003 = vdwg.mxu0
  %v1004 = vmax.f32 %v996, 0.0
  %v1005 = vmax.f32 %v998, 0.0
  %v1006 = vmax.f32 %v1000, 0.0
  %v1007 = vmax.f32 %v1002, 0.0
  %v1008 = vpack.c.bf16 %v1006, %v1004
  %v1009 = vpack.c.bf16 %v1007, %v1005
  %1010 = vmatprep.subr.bf16.mxu0 %v912
  %1011 = vmatpush1.bf16.msra.mxu0 %v911
  %1012 = vmatprep.subr.bf16.mxu0 %v910
  %1013 = vmatpush1.bf16.msra.mxu0 %v909
  %1014 = vmatprep.subr.bf16.mxu0 %v908
  %1015 = vmatpush1.bf16.msra.mxu0 %v907
  %1016 = vmatprep.subr.bf16.mxu0 %v906
  %1017 = vmatpush1.bf16.msra.mxu0 %v905
  %1018 = vmatprep.subr.bf16.mxu0 %v904
  %1019 = vmatpush1.bf16.msra.mxu0 %v903
  %1020 = vmatprep.subr.bf16.mxu0 %v902
  %1021 = vmatpush1.bf16.msra.mxu0 %v901
  %1022 = vmatprep.subr.bf16.mxu0 %v900
  %1023 = vmatpush1.bf16.msra.mxu0 %v899
  %1024 = vmatprep.subr.bf16.mxu0 %v898
  %1025 = vmatpush1.bf16.msra.mxu0 %v897
  %1026 = vmatprep.subr.bf16.mxu0 %v928
  %1027 = vmatpush2.bf16.msra.mxu0 %v927
  %1028 = vmatprep.subr.bf16.mxu0 %v926
  %1029 = vmatpush2.bf16.msra.mxu0 %v925
  %1030 = vmatprep.subr.bf16.mxu0 %v924
  %1031 = vmatpush2.bf16.msra.mxu0 %v923
  %1032 = vmatprep.subr.bf16.mxu0 %v922
  %1033 = vmatpush2.bf16.msra.mxu0 %v921
  %1034 = vmatprep.subr.bf16.mxu0 %v920
  %1035 = vmatpush2.bf16.msra.mxu0 %v919
  %1036 = vmatprep.subr.bf16.mxu0 %v918
  %1037 = vmatpush2.bf16.msra.mxu0 %v917
  %1038 = vmatprep.subr.bf16.mxu0 %v916
  %1039 = vmatpush2.bf16.msra.mxu0 %v915
  %1040 = vmatprep.subr.bf16.mxu0 %v914
  %1041 = vmatpush2.bf16.msra.mxu0 %v913
  %1042 = vmatprep.mubr.bf16.mxu0 %v1009
  %1043 = vmatmul.mubr.bf16.gmra.mxu0 %v1008
  %v1044 = vpop.f32.mrf.mxu0
  %v1045 = vadd.f32 %v62, %v1044
  %v1046 = vpop.f32.mrf.mxu0
  %v1047 = vadd.f32 %v66, %v1046
  %v1048 = vpop.f32.mrf.mxu0
  %v1049 = vadd.f32 %v62, %v1048
  %v1050 = vpop.f32.mrf.mxu0
  %v1051 = vadd.f32 %v66, %v1050
  %1052 = vdwg.mxu0
  %v1053 = vmax.f32 %v1045, 0.0
  %v1054 = vmax.f32 %v1047, 0.0
  %v1055 = vmax.f32 %v1049, 0.0
  %v1056 = vmax.f32 %v1051, 0.0
  %v1057 = vpack.c.bf16 %v1055, %v1053
  %v1058 = vpack.c.bf16 %v1056, %v1054
  %1059 = vmatprep.subr.bf16.mxu0 %v912
  %1060 = vmatpush1.bf16.msra.mxu0 %v911
  %1061 = vmatprep.subr.bf16.mxu0 %v910
  %1062 = vmatpush1.bf16.msra.mxu0 %v909
  %1063 = vmatprep.subr.bf16.mxu0 %v908
  %1064 = vmatpush1.bf16.msra.mxu0 %v907
  %1065 = vmatprep.subr.bf16.mxu0 %v906
  %1066 = vmatpush1.bf16.msra.mxu0 %v905
  %1067 = vmatprep.subr.bf16.mxu0 %v904
  %1068 = vmatpush1.bf16.msra.mxu0 %v903
  %1069 = vmatprep.subr.bf16.mxu0 %v902
  %1070 = vmatpush1.bf16.msra.mxu0 %v901
  %1071 = vmatprep.subr.bf16.mxu0 %v900
  %1072 = vmatpush1.bf16.msra.mxu0 %v899
  %1073 = vmatprep.subr.bf16.mxu0 %v898
  %1074 = vmatpush1.bf16.msra.mxu0 %v897
  %1075 = vmatprep.subr.bf16.mxu0 %v928
  %1076 = vmatpush2.bf16.msra.mxu0 %v927
  %1077 = vmatprep.subr.bf16.mxu0 %v926
  %1078 = vmatpush2.bf16.msra.mxu0 %v925
  %1079 = vmatprep.subr.bf16.mxu0 %v924
  %1080 = vmatpush2.bf16.msra.mxu0 %v923
  %1081 = vmatprep.subr.bf16.mxu0 %v922
  %1082 = vmatpush2.bf16.msra.mxu0 %v921
  %1083 = vmatprep.subr.bf16.mxu0 %v920
  %1084 = vmatpush2.bf16.msra.mxu0 %v919
  %1085 = vmatprep.subr.bf16.mxu0 %v918
  %1086 = vmatpush2.bf16.msra.mxu0 %v917
  %1087 = vmatprep.subr.bf16.mxu0 %v916
  %1088 = vmatpush2.bf16.msra.mxu0 %v915
  %1089 = vmatprep.subr.bf16.mxu0 %v914
  %1090 = vmatpush2.bf16.msra.mxu0 %v913
  %1091 = vmatprep.mubr.bf16.mxu0 %v1058
  %1092 = vmatmul.mubr.bf16.gmra.mxu0 %v1057
  %v1093 = vpop.f32.mrf.mxu0
  %v1094 = vadd.f32 %v62, %v1093
  %v1095 = vpop.f32.mrf.mxu0
  %v1096 = vadd.f32 %v66, %v1095
  %v1097 = vpop.f32.mrf.mxu0
  %v1098 = vadd.f32 %v62, %v1097
  %v1099 = vpop.f32.mrf.mxu0
  %v1100 = vadd.f32 %v66, %v1099
  %1101 = vdwg.mxu0
  %v1102 = vmax.f32 %v1094, 0.0
  %v1103 = vmax.f32 %v1096, 0.0
  %v1104 = vmax.f32 %v1098, 0.0
  %v1105 = vmax.f32 %v1100, 0.0
  %v1106 = vpack.c.bf16 %v1104, %v1102
  %v1107 = vpack.c.bf16 %v1105, %v1103
  %1108 = vmatprep.subr.bf16.mxu0 %v912
  %1109 = vmatpush1.bf16.msra.mxu0 %v911
  %1110 = vmatprep.subr.bf16.mxu0 %v910
  %1111 = vmatpush1.bf16.msra.mxu0 %v909
  %1112 = vmatprep.subr.bf16.mxu0 %v908
  %1113 = vmatpush1.bf16.msra.mxu0 %v907
  %1114 = vmatprep.subr.bf16.mxu0 %v906
  %1115 = vmatpush1.bf16.msra.mxu0 %v905
  %1116 = vmatprep.subr.bf16.mxu0 %v904
  %1117 = vmatpush1.bf16.msra.mxu0 %v903
  %1118 = vmatprep.subr.bf16.mxu0 %v902
  %1119 = vmatpush1.bf16.msra.mxu0 %v901
  %1120 = vmatprep.subr.bf16.mxu0 %v900
  %1121 = vmatpush1.bf16.msra.mxu0 %v899
  %1122 = vmatprep.subr.bf16.mxu0 %v898
  %1123 = vmatpush1.bf16.msra.mxu0 %v897
  %1124 = vmatprep.subr.bf16.mxu0 %v928
  %1125 = vmatpush2.bf16.msra.mxu0 %v927
  %1126 = vmatprep.subr.bf16.mxu0 %v926
  %1127 = vmatpush2.bf16.msra.mxu0 %v925
  %1128 = vmatprep.subr.bf16.mxu0 %v924
  %1129 = vmatpush2.bf16.msra.mxu0 %v923
  %1130 = vmatprep.subr.bf16.mxu0 %v922
  %1131 = vmatpush2.bf16.msra.mxu0 %v921
  %1132 = vmatprep.subr.bf16.mxu0 %v920
  %1133 = vmatpush2.bf16.msra.mxu0 %v919
  %1134 = vmatprep.subr.bf16.mxu0 %v918
  %1135 = vmatpush2.bf16.msra.mxu0 %v917
  %1136 = vmatprep.subr.bf16.mxu0 %v916
  %1137 = vmatpush2.bf16.msra.mxu0 %v915
  %1138 = vmatprep.subr.bf16.mxu0 %v914
  %1139 = vmatpush2.bf16.msra.mxu0 %v913
  %1140 = vmatprep.mubr.bf16.mxu0 %v1107
  %1141 = vmatmul.mubr.bf16.gmra.mxu0 %v1106
  %v1142 = vpop.f32.mrf.mxu0
  %v1143 = vadd.f32 %v62, %v1142
  %v1144 = vpop.f32.mrf.mxu0
  %v1145 = vadd.f32 %v66, %v1144
  %v1146 = vpop.f32.mrf.mxu0
  %v1147 = vadd.f32 %v62, %v1146
  %v1148 = vpop.f32.mrf.mxu0
  %v1149 = vadd.f32 %v66, %v1148
  %1150 = vdwg.mxu0
  %v1151 = vmax.f32 %v1143, 0.0
  %v1152 = vmax.f32 %v1145, 0.0
  %v1153 = vmax.f32 %v1147, 0.0
  %v1154 = vmax.f32 %v1149, 0.0
  %v1155 = vpack.c.bf16 %v1153, %v1151
  %v1156 = vpack.c.bf16 %v1154, %v1152
  %v1157 = vld [vmem:[%s7] sm:$0xff]
  %v1158 = vld [vmem:[%s7 + $0x8] sm:$0xff]
  %v1159 = vld [vmem:[%s7 + $0x10] sm:$0xff]
  %v1160 = vld [vmem:[%s7 + $0x18] sm:$0xff]
  %v1161 = vld [vmem:[%s7 + $0x20] sm:$0xff]
  %v1162 = vld [vmem:[%s7 + $0x28] sm:$0xff]
  %v1163 = vld [vmem:[%s7 + $0x30] sm:$0xff]
  %v1164 = vld [vmem:[%s7 + $0x38] sm:$0xff]
  %v1165 = vld [vmem:[%s7 + $0x40] sm:$0xff]
  %v1166 = vld [vmem:[%s7 + $0x48] sm:$0xff]
  %v1167 = vld [vmem:[%s7 + $0x50] sm:$0xff]
  %v1168 = vld [vmem:[%s7 + $0x58] sm:$0xff]
  %v1169 = vld [vmem:[%s7 + $0x60] sm:$0xff]
  %v1170 = vld [vmem:[%s7 + $0x68] sm:$0xff]
  %v1171 = vld [vmem:[%s7 + $0x70] sm:$0xff]
  %v1172 = vld [vmem:[%s7 + $0x78] sm:$0xff]
  %v1173 = vld [vmem:[%s7 + $0x80] sm:$0xff]
  %v1174 = vld [vmem:[%s7 + $0x88] sm:$0xff]
  %v1175 = vld [vmem:[%s7 + $0x90] sm:$0xff]
  %v1176 = vld [vmem:[%s7 + $0x98] sm:$0xff]
  %v1177 = vld [vmem:[%s7 + $0xa0] sm:$0xff]
  %v1178 = vld [vmem:[%s7 + $0xa8] sm:$0xff]
  %v1179 = vld [vmem:[%s7 + $0xb0] sm:$0xff]
  %v1180 = vld [vmem:[%s7 + $0xb8] sm:$0xff]
  %v1181 = vld [vmem:[%s7 + $0xc0] sm:$0xff]
  %v1182 = vld [vmem:[%s7 + $0xc8] sm:$0xff]
  %v1183 = vld [vmem:[%s7 + $0xd0] sm:$0xff]
  %v1184 = vld [vmem:[%s7 + $0xd8] sm:$0xff]
  %v1185 = vld [vmem:[%s7 + $0xe0] sm:$0xff]
  %v1186 = vld [vmem:[%s7 + $0xe8] sm:$0xff]
  %v1187 = vld [vmem:[%s7 + $0xf0] sm:$0xff]
  %v1188 = vld [vmem:[%s7 + $0xf8] sm:$0xff]
  %v1221 = vunpack.c.l.b16 %v1157
  %v1222 = vunpack.c.h.b16 %v1157
  %v1223 = vunpack.c.l.b16 %v1158
  %v1224 = vunpack.c.h.b16 %v1158
  %v1225 = vunpack.c.l.b16 %v1159
  %v1226 = vunpack.c.h.b16 %v1159
  %v1227 = vunpack.c.l.b16 %v1160
  %v1228 = vunpack.c.h.b16 %v1160
  %v1229 = vunpack.c.l.b16 %v1161
  %v1230 = vunpack.c.h.b16 %v1161
  %v1231 = vunpack.c.l.b16 %v1162
  %v1232 = vunpack.c.h.b16 %v1162
  %v1233 = vunpack.c.l.b16 %v1163
  %v1234 = vunpack.c.h.b16 %v1163
  %v1235 = vunpack.c.l.b16 %v1164
  %v1236 = vunpack.c.h.b16 %v1164
  %v1237 = vunpack.c.l.b16 %v1165
  %v1238 = vunpack.c.h.b16 %v1165
  %v1239 = vunpack.c.l.b16 %v1166
  %v1240 = vunpack.c.h.b16 %v1166
  %v1241 = vunpack.c.l.b16 %v1167
  %v1242 = vunpack.c.h.b16 %v1167
  %v1243 = vunpack.c.l.b16 %v1168
  %v1244 = vunpack.c.h.b16 %v1168
  %v1245 = vunpack.c.l.b16 %v1169
  %v1246 = vunpack.c.h.b16 %v1169
  %v1247 = vunpack.c.l.b16 %v1170
  %v1248 = vunpack.c.h.b16 %v1170
  %v1249 = vunpack.c.l.b16 %v1171
  %v1250 = vunpack.c.h.b16 %v1171
  %v1251 = vunpack.c.l.b16 %v1172
  %v1252 = vunpack.c.h.b16 %v1172
  %v1253 = vunpack.c.l.b16 %v1173
  %v1254 = vunpack.c.h.b16 %v1173
  %v1255 = vunpack.c.l.b16 %v1174
  %v1256 = vunpack.c.h.b16 %v1174
  %v1257 = vunpack.c.l.b16 %v1175
  %v1258 = vunpack.c.h.b16 %v1175
  %v1259 = vunpack.c.l.b16 %v1176
  %v1260 = vunpack.c.h.b16 %v1176
  %v1261 = vunpack.c.l.b16 %v1177
  %v1262 = vunpack.c.h.b16 %v1177
  %v1263 = vunpack.c.l.b16 %v1178
  %v1264 = vunpack.c.h.b16 %v1178
  %v1265 = vunpack.c.l.b16 %v1179
  %v1266 = vunpack.c.h.b16 %v1179
  %v1267 = vunpack.c.l.b16 %v1180
  %v1268 = vunpack.c.h.b16 %v1180
  %v1269 = vunpack.c.l.b16 %v1181
  %v1270 = vunpack.c.h.b16 %v1181
  %v1271 = vunpack.c.l.b16 %v1182
  %v1272 = vunpack.c.h.b16 %v1182
  %v1273 = vunpack.c.l.b16 %v1183
  %v1274 = vunpack.c.h.b16 %v1183
  %v1275 = vunpack.c.l.b16 %v1184
  %v1276 = vunpack.c.h.b16 %v1184
  %v1277 = vunpack.c.l.b16 %v1185
  %v1278 = vunpack.c.h.b16 %v1185
  %v1279 = vunpack.c.l.b16 %v1186
  %v1280 = vunpack.c.h.b16 %v1186
  %v1281 = vunpack.c.l.b16 %v1187
  %v1282 = vunpack.c.h.b16 %v1187
  %v1283 = vunpack.c.l.b16 %v1188
  %v1284 = vunpack.c.h.b16 %v1188
  %v1285 = vpack.c.b16 %v1223, %v1221
  %v1286 = vpack.c.b16 %v1224, %v1222
  %v1287 = vpack.c.b16 %v1227, %v1225
  %v1288 = vpack.c.b16 %v1228, %v1226
  %v1289 = vpack.c.b16 %v1231, %v1229
  %v1290 = vpack.c.b16 %v1232, %v1230
  %v1291 = vpack.c.b16 %v1235, %v1233
  %v1292 = vpack.c.b16 %v1236, %v1234
  %v1293 = vpack.c.b16 %v1239, %v1237
  %v1294 = vpack.c.b16 %v1240, %v1238
  %v1295 = vpack.c.b16 %v1243, %v1241
  %v1296 = vpack.c.b16 %v1244, %v1242
  %v1297 = vpack.c.b16 %v1247, %v1245
  %v1298 = vpack.c.b16 %v1248, %v1246
  %v1299 = vpack.c.b16 %v1251, %v1249
  %v1300 = vpack.c.b16 %v1252, %v1250
  %v1301 = vpack.c.b16 %v1255, %v1253
  %v1302 = vpack.c.b16 %v1256, %v1254
  %v1303 = vpack.c.b16 %v1259, %v1257
  %v1304 = vpack.c.b16 %v1260, %v1258
  %v1305 = vpack.c.b16 %v1263, %v1261
  %v1306 = vpack.c.b16 %v1264, %v1262
  %v1307 = vpack.c.b16 %v1267, %v1265
  %v1308 = vpack.c.b16 %v1268, %v1266
  %v1309 = vpack.c.b16 %v1271, %v1269
  %v1310 = vpack.c.b16 %v1272, %v1270
  %v1311 = vpack.c.b16 %v1275, %v1273
  %v1312 = vpack.c.b16 %v1276, %v1274
  %v1313 = vpack.c.b16 %v1279, %v1277
  %v1314 = vpack.c.b16 %v1280, %v1278
  %v1315 = vpack.c.b16 %v1283, %v1281
  %v1316 = vpack.c.b16 %v1284, %v1282
  %1349 = vmatprep.subr.bf16.mxu0 %v1300
  %1350 = vmatpush1.bf16.msra.mxu0 %v1299
  %1351 = vmatprep.subr.bf16.mxu0 %v1298
  %1352 = vmatpush1.bf16.msra.mxu0 %v1297
  %1353 = vmatprep.subr.bf16.mxu0 %v1296
  %1354 = vmatpush1.bf16.msra.mxu0 %v1295
  %1355 = vmatprep.subr.bf16.mxu0 %v1294
  %1356 = vmatpush1.bf16.msra.mxu0 %v1293
  %1357 = vmatprep.subr.bf16.mxu0 %v1292
  %1358 = vmatpush1.bf16.msra.mxu0 %v1291
  %1359 = vmatprep.subr.bf16.mxu0 %v1290
  %1360 = vmatpush1.bf16.msra.mxu0 %v1289
  %1361 = vmatprep.subr.bf16.mxu0 %v1288
  %1362 = vmatpush1.bf16.msra.mxu0 %v1287
  %1363 = vmatprep.subr.bf16.mxu0 %v1286
  %1364 = vmatpush1.bf16.msra.mxu0 %v1285
  %1365 = vmatprep.subr.bf16.mxu0 %v1316
  %1366 = vmatpush2.bf16.msra.mxu0 %v1315
  %1367 = vmatprep.subr.bf16.mxu0 %v1314
  %1368 = vmatpush2.bf16.msra.mxu0 %v1313
  %1369 = vmatprep.subr.bf16.mxu0 %v1312
  %1370 = vmatpush2.bf16.msra.mxu0 %v1311
  %1371 = vmatprep.subr.bf16.mxu0 %v1310
  %1372 = vmatpush2.bf16.msra.mxu0 %v1309
  %1373 = vmatprep.subr.bf16.mxu0 %v1308
  %1374 = vmatpush2.bf16.msra.mxu0 %v1307
  %1375 = vmatprep.subr.bf16.mxu0 %v1306
  %1376 = vmatpush2.bf16.msra.mxu0 %v1305
  %1377 = vmatprep.subr.bf16.mxu0 %v1304
  %1378 = vmatpush2.bf16.msra.mxu0 %v1303
  %1379 = vmatprep.subr.bf16.mxu0 %v1302
  %1380 = vmatpush2.bf16.msra.mxu0 %v1301
  %1381 = vmatprep.mubr.bf16.mxu0 %v1156
  %1382 = vmatmul.mubr.bf16.gmra.mxu0 %v1155
  %v1383 = vpop.f32.mrf.mxu0
  %v1384 = vadd.f32 %v525, %v1383
  %v1385 = vpop.f32.mrf.mxu0
  %v1386 = vadd.f32 %v527, %v1385
  %v1387 = vpop.f32.mrf.mxu0
  %v1388 = vadd.f32 %v529, %v1387
  %v1389 = vpop.f32.mrf.mxu0
  %v1390 = vadd.f32 %v531, %v1389
  %1391 = vdwg.mxu0
  %v1392 = vadd.f32 %v1384, %v74
  %v1393 = vadd.f32 %v1386, %v78
  %v1394 = vadd.f32 %v1388, %v74
  %v1395 = vadd.f32 %v1390, %v78
  %v1396 = vmax.f32 %v1392, 0.0
  %v1397 = vmax.f32 %v1393, 0.0
  %v1398 = vmax.f32 %v1394, 0.0
  %v1399 = vmax.f32 %v1395, 0.0
  %v1400 = vpack.c.bf16 %v1398, %v1396
  %v1401 = vpack.c.bf16 %v1399, %v1397
  %1402 = vmatprep.subr.bf16.mxu0 %v912
  %1403 = vmatpush1.bf16.msra.mxu0 %v911
  %1404 = vmatprep.subr.bf16.mxu0 %v910
  %1405 = vmatpush1.bf16.msra.mxu0 %v909
  %1406 = vmatprep.subr.bf16.mxu0 %v908
  %1407 = vmatpush1.bf16.msra.mxu0 %v907
  %1408 = vmatprep.subr.bf16.mxu0 %v906
  %1409 = vmatpush1.bf16.msra.mxu0 %v905
  %1410 = vmatprep.subr.bf16.mxu0 %v904
  %1411 = vmatpush1.bf16.msra.mxu0 %v903
  %1412 = vmatprep.subr.bf16.mxu0 %v902
  %1413 = vmatpush1.bf16.msra.mxu0 %v901
  %1414 = vmatprep.subr.bf16.mxu0 %v900
  %1415 = vmatpush1.bf16.msra.mxu0 %v899
  %1416 = vmatprep.subr.bf16.mxu0 %v898
  %1417 = vmatpush1.bf16.msra.mxu0 %v897
  %1418 = vmatprep.subr.bf16.mxu0 %v928
  %1419 = vmatpush2.bf16.msra.mxu0 %v927
  %1420 = vmatprep.subr.bf16.mxu0 %v926
  %1421 = vmatpush2.bf16.msra.mxu0 %v925
  %1422 = vmatprep.subr.bf16.mxu0 %v924
  %1423 = vmatpush2.bf16.msra.mxu0 %v923
  %1424 = vmatprep.subr.bf16.mxu0 %v922
  %1425 = vmatpush2.bf16.msra.mxu0 %v921
  %1426 = vmatprep.subr.bf16.mxu0 %v920
  %1427 = vmatpush2.bf16.msra.mxu0 %v919
  %1428 = vmatprep.subr.bf16.mxu0 %v918
  %1429 = vmatpush2.bf16.msra.mxu0 %v917
  %1430 = vmatprep.subr.bf16.mxu0 %v916
  %1431 = vmatpush2.bf16.msra.mxu0 %v915
  %1432 = vmatprep.subr.bf16.mxu0 %v914
  %1433 = vmatpush2.bf16.msra.mxu0 %v913
  %1434 = vmatprep.mubr.bf16.mxu0 %v1401
  %1435 = vmatmul.mubr.bf16.gmra.mxu0 %v1400
  %v1436 = vpop.f32.mrf.mxu0
  %v1437 = vadd.f32 %v62, %v1436
  %v1438 = vpop.f32.mrf.mxu0
  %v1439 = vadd.f32 %v66, %v1438
  %v1440 = vpop.f32.mrf.mxu0
  %v1441 = vadd.f32 %v62, %v1440
  %v1442 = vpop.f32.mrf.mxu0
  %v1443 = vadd.f32 %v66, %v1442
  %1444 = vdwg.mxu0
  %v1445 = vmax.f32 %v1437, 0.0
  %v1446 = vmax.f32 %v1439, 0.0
  %v1447 = vmax.f32 %v1441, 0.0
  %v1448 = vmax.f32 %v1443, 0.0
  %v1449 = vpack.c.bf16 %v1447, %v1445
  %v1450 = vpack.c.bf16 %v1448, %v1446
  %v1451 = vld [vmem:[%s9] sm:$0xff]
  %v1452 = vld [vmem:[%s9 + $0x8] sm:$0xff]
  %v1453 = vld [vmem:[%s9 + $0x10] sm:$0xff]
  %v1454 = vld [vmem:[%s9 + $0x18] sm:$0xff]
  %v1455 = vld [vmem:[%s9 + $0x20] sm:$0xff]
  %v1456 = vld [vmem:[%s9 + $0x28] sm:$0xff]
  %v1457 = vld [vmem:[%s9 + $0x30] sm:$0xff]
  %v1458 = vld [vmem:[%s9 + $0x38] sm:$0xff]
  %v1459 = vld [vmem:[%s9 + $0x40] sm:$0xff]
  %v1460 = vld [vmem:[%s9 + $0x48] sm:$0xff]
  %v1461 = vld [vmem:[%s9 + $0x50] sm:$0xff]
  %v1462 = vld [vmem:[%s9 + $0x58] sm:$0xff]
  %v1463 = vld [vmem:[%s9 + $0x60] sm:$0xff]
  %v1464 = vld [vmem:[%s9 + $0x68] sm:$0xff]
  %v1465 = vld [vmem:[%s9 + $0x70] sm:$0xff]
  %v1466 = vld [vmem:[%s9 + $0x78] sm:$0xff]
  %v1467 = vld [vmem:[%s9 + $0x80] sm:$0xff]
  %v1468 = vld [vmem:[%s9 + $0x88] sm:$0xff]
  %v1469 = vld [vmem:[%s9 + $0x90] sm:$0xff]
  %v1470 = vld [vmem:[%s9 + $0x98] sm:$0xff]
  %v1471 = vld [vmem:[%s9 + $0xa0] sm:$0xff]
  %v1472 = vld [vmem:[%s9 + $0xa8] sm:$0xff]
  %v1473 = vld [vmem:[%s9 + $0xb0] sm:$0xff]
  %v1474 = vld [vmem:[%s9 + $0xb8] sm:$0xff]
  %v1475 = vld [vmem:[%s9 + $0xc0] sm:$0xff]
  %v1476 = vld [vmem:[%s9 + $0xc8] sm:$0xff]
  %v1477 = vld [vmem:[%s9 + $0xd0] sm:$0xff]
  %v1478 = vld [vmem:[%s9 + $0xd8] sm:$0xff]
  %v1479 = vld [vmem:[%s9 + $0xe0] sm:$0xff]
  %v1480 = vld [vmem:[%s9 + $0xe8] sm:$0xff]
  %v1481 = vld [vmem:[%s9 + $0xf0] sm:$0xff]
  %v1482 = vld [vmem:[%s9 + $0xf8] sm:$0xff]
  %v1515 = vunpack.c.l.b16 %v1451
  %v1516 = vunpack.c.h.b16 %v1451
  %v1517 = vunpack.c.l.b16 %v1452
  %v1518 = vunpack.c.h.b16 %v1452
  %v1519 = vunpack.c.l.b16 %v1453
  %v1520 = vunpack.c.h.b16 %v1453
  %v1521 = vunpack.c.l.b16 %v1454
  %v1522 = vunpack.c.h.b16 %v1454
  %v1523 = vunpack.c.l.b16 %v1455
  %v1524 = vunpack.c.h.b16 %v1455
  %v1525 = vunpack.c.l.b16 %v1456
  %v1526 = vunpack.c.h.b16 %v1456
  %v1527 = vunpack.c.l.b16 %v1457
  %v1528 = vunpack.c.h.b16 %v1457
  %v1529 = vunpack.c.l.b16 %v1458
  %v1530 = vunpack.c.h.b16 %v1458
  %v1531 = vunpack.c.l.b16 %v1459
  %v1532 = vunpack.c.h.b16 %v1459
  %v1533 = vunpack.c.l.b16 %v1460
  %v1534 = vunpack.c.h.b16 %v1460
  %v1535 = vunpack.c.l.b16 %v1461
  %v1536 = vunpack.c.h.b16 %v1461
  %v1537 = vunpack.c.l.b16 %v1462
  %v1538 = vunpack.c.h.b16 %v1462
  %v1539 = vunpack.c.l.b16 %v1463
  %v1540 = vunpack.c.h.b16 %v1463
  %v1541 = vunpack.c.l.b16 %v1464
  %v1542 = vunpack.c.h.b16 %v1464
  %v1543 = vunpack.c.l.b16 %v1465
  %v1544 = vunpack.c.h.b16 %v1465
  %v1545 = vunpack.c.l.b16 %v1466
  %v1546 = vunpack.c.h.b16 %v1466
  %v1547 = vunpack.c.l.b16 %v1467
  %v1548 = vunpack.c.h.b16 %v1467
  %v1549 = vunpack.c.l.b16 %v1468
  %v1550 = vunpack.c.h.b16 %v1468
  %v1551 = vunpack.c.l.b16 %v1469
  %v1552 = vunpack.c.h.b16 %v1469
  %v1553 = vunpack.c.l.b16 %v1470
  %v1554 = vunpack.c.h.b16 %v1470
  %v1555 = vunpack.c.l.b16 %v1471
  %v1556 = vunpack.c.h.b16 %v1471
  %v1557 = vunpack.c.l.b16 %v1472
  %v1558 = vunpack.c.h.b16 %v1472
  %v1559 = vunpack.c.l.b16 %v1473
  %v1560 = vunpack.c.h.b16 %v1473
  %v1561 = vunpack.c.l.b16 %v1474
  %v1562 = vunpack.c.h.b16 %v1474
  %v1563 = vunpack.c.l.b16 %v1475
  %v1564 = vunpack.c.h.b16 %v1475
  %v1565 = vunpack.c.l.b16 %v1476
  %v1566 = vunpack.c.h.b16 %v1476
  %v1567 = vunpack.c.l.b16 %v1477
  %v1568 = vunpack.c.h.b16 %v1477
  %v1569 = vunpack.c.l.b16 %v1478
  %v1570 = vunpack.c.h.b16 %v1478
  %v1571 = vunpack.c.l.b16 %v1479
  %v1572 = vunpack.c.h.b16 %v1479
  %v1573 = vunpack.c.l.b16 %v1480
  %v1574 = vunpack.c.h.b16 %v1480
  %v1575 = vunpack.c.l.b16 %v1481
  %v1576 = vunpack.c.h.b16 %v1481
  %v1577 = vunpack.c.l.b16 %v1482
  %v1578 = vunpack.c.h.b16 %v1482
  %v1579 = vpack.c.b16 %v1517, %v1515
  %v1580 = vpack.c.b16 %v1518, %v1516
  %v1581 = vpack.c.b16 %v1521, %v1519
  %v1582 = vpack.c.b16 %v1522, %v1520
  %v1583 = vpack.c.b16 %v1525, %v1523
  %v1584 = vpack.c.b16 %v1526, %v1524
  %v1585 = vpack.c.b16 %v1529, %v1527
  %v1586 = vpack.c.b16 %v1530, %v1528
  %v1587 = vpack.c.b16 %v1533, %v1531
  %v1588 = vpack.c.b16 %v1534, %v1532
  %v1589 = vpack.c.b16 %v1537, %v1535
  %v1590 = vpack.c.b16 %v1538, %v1536
  %v1591 = vpack.c.b16 %v1541, %v1539
  %v1592 = vpack.c.b16 %v1542, %v1540
  %v1593 = vpack.c.b16 %v1545, %v1543
  %v1594 = vpack.c.b16 %v1546, %v1544
  %v1595 = vpack.c.b16 %v1549, %v1547
  %v1596 = vpack.c.b16 %v1550, %v1548
  %v1597 = vpack.c.b16 %v1553, %v1551
  %v1598 = vpack.c.b16 %v1554, %v1552
  %v1599 = vpack.c.b16 %v1557, %v1555
  %v1600 = vpack.c.b16 %v1558, %v1556
  %v1601 = vpack.c.b16 %v1561, %v1559
  %v1602 = vpack.c.b16 %v1562, %v1560
  %v1603 = vpack.c.b16 %v1565, %v1563
  %v1604 = vpack.c.b16 %v1566, %v1564
  %v1605 = vpack.c.b16 %v1569, %v1567
  %v1606 = vpack.c.b16 %v1570, %v1568
  %v1607 = vpack.c.b16 %v1573, %v1571
  %v1608 = vpack.c.b16 %v1574, %v1572
  %v1609 = vpack.c.b16 %v1577, %v1575
  %v1610 = vpack.c.b16 %v1578, %v1576
  %1643 = vmatprep.subr.bf16.mxu0 %v1594
  %1644 = vmatpush1.bf16.msra.mxu0 %v1593
  %1645 = vmatprep.subr.bf16.mxu0 %v1592
  %1646 = vmatpush1.bf16.msra.mxu0 %v1591
  %1647 = vmatprep.subr.bf16.mxu0 %v1590
  %1648 = vmatpush1.bf16.msra.mxu0 %v1589
  %1649 = vmatprep.subr.bf16.mxu0 %v1588
  %1650 = vmatpush1.bf16.msra.mxu0 %v1587
  %1651 = vmatprep.subr.bf16.mxu0 %v1586
  %1652 = vmatpush1.bf16.msra.mxu0 %v1585
  %1653 = vmatprep.subr.bf16.mxu0 %v1584
  %1654 = vmatpush1.bf16.msra.mxu0 %v1583
  %1655 = vmatprep.subr.bf16.mxu0 %v1582
  %1656 = vmatpush1.bf16.msra.mxu0 %v1581
  %1657 = vmatprep.subr.bf16.mxu0 %v1580
  %1658 = vmatpush1.bf16.msra.mxu0 %v1579
  %1659 = vmatprep.subr.bf16.mxu0 %v1610
  %1660 = vmatpush2.bf16.msra.mxu0 %v1609
  %1661 = vmatprep.subr.bf16.mxu0 %v1608
  %1662 = vmatpush2.bf16.msra.mxu0 %v1607
  %1663 = vmatprep.subr.bf16.mxu0 %v1606
  %1664 = vmatpush2.bf16.msra.mxu0 %v1605
  %1665 = vmatprep.subr.bf16.mxu0 %v1604
  %1666 = vmatpush2.bf16.msra.mxu0 %v1603
  %1667 = vmatprep.subr.bf16.mxu0 %v1602
  %1668 = vmatpush2.bf16.msra.mxu0 %v1601
  %1669 = vmatprep.subr.bf16.mxu0 %v1600
  %1670 = vmatpush2.bf16.msra.mxu0 %v1599
  %1671 = vmatprep.subr.bf16.mxu0 %v1598
  %1672 = vmatpush2.bf16.msra.mxu0 %v1597
  %1673 = vmatprep.subr.bf16.mxu0 %v1596
  %1674 = vmatpush2.bf16.msra.mxu0 %v1595
  %1675 = vmatprep.mubr.bf16.mxu0 %v1450
  %1676 = vmatmul.mubr.bf16.gmra.mxu0 %v1449
  %v1677 = vpop.f32.mrf.mxu0
  %v1678 = vadd.f32 0.0, %v1677
  %v1679 = vpop.f32.mrf.mxu0
  %v1680 = vadd.f32 0.0, %v1679
  %v1681 = vpop.f32.mrf.mxu0
  %v1682 = vadd.f32 0.0, %v1681
  %v1683 = vpop.f32.mrf.mxu0
  %v1684 = vadd.f32 0.0, %v1683
  %1685 = vdwg.mxu0
  %v1686 = vld [vmem:[%s2] sm:$0xff]
  %v1688 = vcombine.high %v1686, %v1686
  %v1690 = vunpack.c.l.s4 1966171168
  %v1691 = vunpack.c.0.s8 %v1690
  %v1692 = vlaneseq
  %v1693 = vshrl.u32 %v1692, 7
  %v1694 = vsub.s32 %v1691, %v1693
  %v1695 = vrot.slane %v1686, %v1694
  %v1697 = vunpack.c.l.s4 1966171168
  %v1698 = vunpack.c.0.s8 %v1697
  %v1699 = vlaneseq
  %v1700 = vshrl.u32 %v1699, 7
  %v1701 = vsub.s32 %v1698, %v1700
  %v1702 = vrot.slane %v1688, %v1701
  %v1703 = vcombine.high %v1695, %v1695
  %v1704 = vcombine.high %v1702, %v1702
  %v1706 = vunpack.c.l.s4 1966171168
  %v1707 = vunpack.c.0.s8 %v1706
  %v1708 = vlaneseq
  %v1709 = vshrl.u32 %v1708, 7
  %v1710 = vsub.s32 %v1707, %v1709
  %v1711 = vrot.slane %v1695, %v1710
  %v1713 = vunpack.c.l.s4 1966171168
  %v1714 = vunpack.c.0.s8 %v1713
  %v1715 = vlaneseq
  %v1716 = vshrl.u32 %v1715, 7
  %v1717 = vsub.s32 %v1714, %v1716
  %v1718 = vrot.slane %v1702, %v1717
  %v1720 = vunpack.c.l.s4 1966171168
  %v1721 = vunpack.c.0.s8 %v1720
  %v1722 = vlaneseq
  %v1723 = vshrl.u32 %v1722, 7
  %v1724 = vsub.s32 %v1721, %v1723
  %v1725 = vrot.slane %v1703, %v1724
  %v1727 = vunpack.c.l.s4 1966171168
  %v1728 = vunpack.c.0.s8 %v1727
  %v1729 = vlaneseq
  %v1730 = vshrl.u32 %v1729, 7
  %v1731 = vsub.s32 %v1728, %v1730
  %v1732 = vrot.slane %v1704, %v1731
  %v1733 = vcombine.high %v1711, %v1711
  %v1734 = vcombine.high %v1718, %v1718
  %v1735 = vcombine.high %v1725, %v1725
  %v1736 = vcombine.high %v1732, %v1732
  %v1737 = vlaneseq
  %v1738 = vshrl.u32 %v1737, 7
  %v1739 = vsub.s32 0, %v1738
  %v1740 = vrot.slane %v1711, %v1739
  %v1741 = vlaneseq
  %v1742 = vshrl.u32 %v1741, 7
  %v1743 = vsub.s32 0, %v1742
  %v1744 = vrot.slane %v1725, %v1743
  %v1745 = vlaneseq
  %v1746 = vshrl.u32 %v1745, 7
  %v1747 = vsub.s32 0, %v1746
  %v1748 = vrot.slane %v1733, %v1747
  %v1749 = vlaneseq
  %v1750 = vshrl.u32 %v1749, 7
  %v1751 = vsub.s32 0, %v1750
  %v1752 = vrot.slane %v1735, %v1751
  %v1753 = vlaneseq
  %v1754 = vshrl.u32 %v1753, 7
  %v1755 = vsub.s32 0, %v1754
  %v1756 = vrot.slane %v1718, %v1755
  %v1757 = vlaneseq
  %v1758 = vshrl.u32 %v1757, 7
  %v1759 = vsub.s32 0, %v1758
  %v1760 = vrot.slane %v1732, %v1759
  %v1761 = vlaneseq
  %v1762 = vshrl.u32 %v1761, 7
  %v1763 = vsub.s32 0, %v1762
  %v1764 = vrot.slane %v1734, %v1763
  %v1765 = vlaneseq
  %v1766 = vshrl.u32 %v1765, 7
  %v1767 = vsub.s32 0, %v1766
  %v1768 = vrot.slane %v1736, %v1767
  %v1769 = vcombine.low %v1740, %v1744
  %v1770 = vcombine.low %v1748, %v1752
  %v1772 = vunpack.c.l.s4 1983009808
  %v1773 = vunpack.c.0.s8 %v1772
  %v1774 = vlaneseq
  %v1775 = vshrl.u32 %v1774, 7
  %v1776 = vsub.s32 %v1773, %v1775
  %v1777 = vrot.slane %v1769, %v1776
  %v1779 = vunpack.c.l.s4 1983009808
  %v1780 = vunpack.c.0.s8 %v1779
  %v1781 = vlaneseq
  %v1782 = vshrl.u32 %v1781, 7
  %v1783 = vsub.s32 %v1780, %v1782
  %v1784 = vrot.slane %v1770, %v1783
  %v1785 = vcombine.low %v1777, %v1784
  %v1786 = vcombine.low %v1756, %v1760
  %v1787 = vcombine.low %v1764, %v1768
  %v1789 = vunpack.c.l.s4 1983009808
  %v1790 = vunpack.c.0.s8 %v1789
  %v1791 = vlaneseq
  %v1792 = vshrl.u32 %v1791, 7
  %v1793 = vsub.s32 %v1790, %v1792
  %v1794 = vrot.slane %v1786, %v1793
  %v1796 = vunpack.c.l.s4 1983009808
  %v1797 = vunpack.c.0.s8 %v1796
  %v1798 = vlaneseq
  %v1799 = vshrl.u32 %v1798, 7
  %v1800 = vsub.s32 %v1797, %v1799
  %v1801 = vrot.slane %v1787, %v1800
  %v1802 = vcombine.low %v1794, %v1801
  %v1805 = vadd.f32 %v1678, %v1785
  %v1806 = vadd.f32 %v1682, %v1802
  %v1807 = vadd.f32 %v1805, %v86
  %v1808 = vadd.f32 %v1806, %v86
  %v1809 = vmax.f32 %v1807, 0.0
  %v1810 = vmax.f32 %v1808, 0.0
  %v1811 = vpack.c.bf16 %v1810, %v1809
  %v1812 = vld [vmem:[%s11] sm:$0xf]
  %v1813 = vld [vmem:[%s11 + $0x4] sm:$0xf]
  %v1814 = vld [vmem:[%s11 + $0x8] sm:$0xf]
  %v1815 = vld [vmem:[%s11 + $0xc] sm:$0xf]
  %v1816 = vld [vmem:[%s11 + $0x10] sm:$0xf]
  %v1817 = vld [vmem:[%s11 + $0x14] sm:$0xf]
  %v1818 = vld [vmem:[%s11 + $0x18] sm:$0xf]
  %v1819 = vld [vmem:[%s11 + $0x1c] sm:$0xf]
  %v1820 = vld [vmem:[%s11 + $0x20] sm:$0xf]
  %v1821 = vld [vmem:[%s11 + $0x24] sm:$0xf]
  %v1822 = vld [vmem:[%s11 + $0x28] sm:$0xf]
  %v1823 = vld [vmem:[%s11 + $0x2c] sm:$0xf]
  %v1824 = vld [vmem:[%s11 + $0x30] sm:$0xf]
  %v1825 = vld [vmem:[%s11 + $0x34] sm:$0xf]
  %v1826 = vld [vmem:[%s11 + $0x38] sm:$0xf]
  %v1827 = vld [vmem:[%s11 + $0x3c] sm:$0xf]
  %v1844 = vunpack.c.l.b16 %v1812
  %v1845 = vunpack.c.l.b16 %v1813
  %v1846 = vunpack.c.l.b16 %v1814
  %v1847 = vunpack.c.l.b16 %v1815
  %v1848 = vunpack.c.l.b16 %v1816
  %v1849 = vunpack.c.l.b16 %v1817
  %v1850 = vunpack.c.l.b16 %v1818
  %v1851 = vunpack.c.l.b16 %v1819
  %v1852 = vunpack.c.l.b16 %v1820
  %v1853 = vunpack.c.l.b16 %v1821
  %v1854 = vunpack.c.l.b16 %v1822
  %v1855 = vunpack.c.l.b16 %v1823
  %v1856 = vunpack.c.l.b16 %v1824
  %v1857 = vunpack.c.l.b16 %v1825
  %v1858 = vunpack.c.l.b16 %v1826
  %v1859 = vunpack.c.l.b16 %v1827
  %v1860 = vpack.c.b16 %v1845, %v1844
  %v1861 = vpack.c.b16 %v1847, %v1846
  %v1862 = vpack.c.b16 %v1849, %v1848
  %v1863 = vpack.c.b16 %v1851, %v1850
  %v1864 = vpack.c.b16 %v1853, %v1852
  %v1865 = vpack.c.b16 %v1855, %v1854
  %v1866 = vpack.c.b16 %v1857, %v1856
  %v1867 = vpack.c.b16 %v1859, %v1858
  %1876 = vmatprep.subr.bf16.mxu0 0
  %1877 = vmatpush1.bf16.msra.mxu0 %v1867
  %1878 = vmatprep.subr.bf16.mxu0 0
  %1879 = vmatpush1.bf16.msra.mxu0 %v1866
  %1880 = vmatprep.subr.bf16.mxu0 0
  %1881 = vmatpush1.bf16.msra.mxu0 %v1865
  %1882 = vmatprep.subr.bf16.mxu0 0
  %1883 = vmatpush1.bf16.msra.mxu0 %v1864
  %1884 = vmatprep.subr.bf16.mxu0 0
  %1885 = vmatpush1.bf16.msra.mxu0 %v1863
  %1886 = vmatprep.subr.bf16.mxu0 0
  %1887 = vmatpush1.bf16.msra.mxu0 %v1862
  %1888 = vmatprep.subr.bf16.mxu0 0
  %1889 = vmatpush1.bf16.msra.mxu0 %v1861
  %1890 = vmatprep.subr.bf16.mxu0 0
  %1891 = vmatpush1.bf16.msra.mxu0 %v1860
  %1892 = vmatprep.subr.bf16.mxu0 0
  %1893 = vmatpush2.bf16.msra.mxu0 0
  %1894 = vmatprep.subr.bf16.mxu0 0
  %1895 = vmatpush2.bf16.msra.mxu0 0
  %1896 = vmatprep.subr.bf16.mxu0 0
  %1897 = vmatpush2.bf16.msra.mxu0 0
  %1898 = vmatprep.subr.bf16.mxu0 0
  %1899 = vmatpush2.bf16.msra.mxu0 0
  %1900 = vmatprep.subr.bf16.mxu0 0
  %1901 = vmatpush2.bf16.msra.mxu0 0
  %1902 = vmatprep.subr.bf16.mxu0 0
  %1903 = vmatpush2.bf16.msra.mxu0 0
  %1904 = vmatprep.subr.bf16.mxu0 0
  %1905 = vmatpush2.bf16.msra.mxu0 0
  %1906 = vmatprep.subr.bf16.mxu0 0
  %1907 = vmatpush2.bf16.msra.mxu0 0
  %1908 = vmatprep.mubr.bf16.mxu0 0
  %1909 = vmatmul.mubr.bf16.gmra.mxu0 %v1811
  %v1910 = vpop.f32.mrf.mxu0
  %v1911 = vadd.f32 0.0, %v1910
  %v1912 = vpop.f32.mrf.mxu0
  %v1913 = vpop.f32.mrf.mxu0
  %v1914 = vadd.f32 0.0, %v1913
  %v1915 = vpop.f32.mrf.mxu0
  %1916 = vdwg.mxu0
  %v1917 = vadd.f32 %v1680, %v1911
  %v1918 = vadd.f32 %v1684, %v1914
  %v1919 = vadd.f32 %v1917, %v93
  %v1920 = vadd.f32 %v1918, %v93
  %v1921 = vxor.u32 %v1919, 2147483648
  %v1922 = vxor.u32 %v1920, 2147483648
  %v1923 = vmul.f32 %v1921, 1.442695
  %v1924 = vpow.pop %v1923
  %v1925 = vmul.f32 %v1922, 1.442695
  %v1926 = vpow.pop %v1925
  %v1927 = vadd.f32 %v1924, 1.0
  %v1928 = vadd.f32 %v1926, 1.0
  %v1929 = vrcp.pop %v1927
  %v1930 = vmul.f32 1.0, %v1929
  %v1931 = vrcp.pop %v1928
  %v1932 = vmul.f32 1.0, %v1931
  %vm1933 = vcmask 261120
  %1934 = vst.msk [vmem:[%s13] sm:$0xff] %vm1933, %v1930
  %1935 = vst.msk [vmem:[%s13 + $0x8] sm:$0xff] %vm1933, %v1932
  // Predicated region
  $region54: #{nerf_forward.1} parent=0 // pred_check
    _
  $region55: #{nerf_forward.1} parent=0 // pred_check_branch
    %1937 = sbr.rel (0) target = $region57
  $region56: #{nerf_forward.1} parent=0 // pred_region
    _
  $region57: #{nerf_forward.1} parent=0 // pred_fallthru
    _
  // Predicated region
  $region58: #{nerf_forward.1} parent=0 // pred_check
    _
  $region59: #{nerf_forward.1} parent=0 // pred_check_branch
    %1939 = sbr.rel (0) target = $region61
  $region60: #{nerf_forward.1} parent=0 // pred_region
    _
  $region61: #{nerf_forward.1} parent=0 // pred_fallthru
    _

</llo_original>
